<compile_context>
chip_gen: v5e
topology: v5e:2x2
jax: 0.10.0
libtpu: 0.0.40
codegen_flags: <defaults>
</compile_context>

<pallas_src>
import functools
import math

import jax
import jax.numpy as jnp
from jax.experimental import pallas as pl
from jax.experimental.pallas import tpu as pltpu

_MiB = 1024 * 1024
_N_STATE = 4   # state planes: 0=v, 1=refrac_count, 2=trace, 3=summed


def _if_fused_kernel(x_ref, st_in, s_out, st_out, *, n_steps, dt, thresh,
                     reset, refrac, lbound, trace_decay, trace_scale,
                     traces_additive):
    tb = pl.program_id(1)

    # Load persistent state into the VMEM-resident output block on the first
    # time block of this row tile; the block's index does not change along the
    # (innermost, "arbitrary") time axis, so it stays resident and is written
    # back to HBM only once per row tile.
    @pl.when(tb == 0)
    def _():
        st_out[...] = st_in[...]

    # n_steps is a small static constant -> fully unrolled, LLO-visible.
    for tc in range(n_steps):
        x = x_ref[tc].astype(jnp.float32)      # upcast in-kernel; HBM stays narrow
        v = st_out[0]
        rc = st_out[1]
        tr = st_out[2]

        # integrate input only where not refractory
        v = v + jnp.where(rc <= 0.0, x, jnp.float32(0.0))
        # decrement refractory counter
        rc = rc - jnp.float32(dt)
        # spike detection
        s = v >= jnp.float32(thresh)
        # refractory period + voltage reset on spikes
        rc = jnp.where(s, jnp.float32(refrac), rc)
        v = jnp.where(s, jnp.float32(reset), v)
        # lower bound on voltage
        if lbound is not None:
            v = jnp.maximum(v, jnp.float32(lbound))
        # spike-trace update (Nodes.forward)
        tr = tr * jnp.float32(trace_decay)
        if traces_additive:
            tr = tr + jnp.float32(trace_scale) * s.astype(tr.dtype)
        else:
            tr = jnp.where(s, jnp.float32(trace_scale), tr)

        st_out[0] = v
        st_out[1] = rc
        st_out[2] = tr
        st_out[3] = st_out[3] + x              # summed-input update (Nodes.forward)
        s_out[tc] = s.astype(jnp.int8)         # 1 B/elem spike raster


def _vmem_capacity_bytes():
    """Physical VMEM capacity (128 MiB v5e/v6e, 64 MiB v7x); safe fallback."""
    try:
        info = pltpu.get_tpu_info()
        cap = int(getattr(info, "vmem_capacity_bytes", 0))
        if cap > 0:
            return cap
    except Exception:
        pass
    return 64 * _MiB      # conservative (v7x-sized) fallback works everywhere


def _choose_layout(total, tile_cap_elems):
    """Pick a lane-dense (rows, cols, row_tile) layout for `total` elements.

    cols is a multiple of 128 (lane dim); row_tile is a multiple of 32 so the
    int8 spike blocks hit the (32,128) tiling (unmasked full-width stores);
    rows is a multiple of row_tile and there are always >= 2 row tiles so the
    'parallel' row axis can shard across both TensorCores on v7x."""
    lane = 128
    cols = 1024
    # Shrink cols (not below the 128-lane width) until there are >= 64 rows.
    while cols > lane and -(-total // cols) < 64:
        cols //= 2
    rows = -(-total // cols)
    rows = max(64, -(-rows // 32) * 32)
    cap_rows = max(32, (tile_cap_elems // cols) // 32 * 32)
    half_rows = max(32, (rows // 2) // 32 * 32)
    row_tile = min(cap_rows, half_rows)
    rows = -(-rows // row_tile) * row_tile
    return rows, cols, row_tile


def if_nodes_run(xs, v, refrac_count, trace, summed, *,
                 dt=1.0, thresh=-52.0, reset=-65.0, refrac=5.0,
                 lbound=None, tc_trace=20.0, trace_scale=1.0,
                 traces_additive=False):
    """Run T fused IFNodes simulation steps in a single Pallas kernel.

    xs: (T, batch, *shape) inputs (float32 or bfloat16), one slice per step.
    v, refrac_count, trace, summed: (batch, *shape) float32 state.
    Returns (spikes[T, batch, *shape] int8 {0,1}, v, refrac_count, trace, summed).
    """
    T = xs.shape[0]
    state_shape = v.shape
    assert xs.shape[1:] == state_shape
    total = int(math.prod(state_shape))

    # Keep xs in the caller's (possibly narrow) dtype in HBM.
    if xs.dtype not in (jnp.float32, jnp.bfloat16):
        xs = xs.astype(jnp.float32)
    x_bytes = jnp.dtype(xs.dtype).itemsize

    vmem_cap = _vmem_capacity_bytes()
    big_vmem = vmem_cap >= 96 * _MiB               # v5e/v6e (128 MiB) vs v7x (64 MiB)
    tile_cap_elems = (512 * 1024) if big_vmem else (256 * 1024)  # 2 MiB / 1 MiB f32 plane
    tc_max = 8 if big_vmem else 4

    rows, cols, row_tile = _choose_layout(total, tile_cap_elems)
    padded = rows * cols
    pad = padded - total
    n_row_tiles = rows // row_tile

    # Time-block depth: largest divisor of T that is <= tc_max.
    n_steps = max(d for d in range(1, min(tc_max, T) + 1) if T % d == 0)
    n_time_blocks = T // n_steps

    x2 = xs.reshape(T, total)
    if pad:
        x2 = jnp.pad(x2, ((0, 0), (0, pad)))
    x2 = x2.reshape(T, rows, cols)

    def to_plane(a):
        flat = a.reshape(total).astype(jnp.float32)
        if pad:
            flat = jnp.pad(flat, (0, pad))
        return flat.reshape(rows, cols)

    # Single stacked state stream: 2 pipelined streams (in+out) instead of 8.
    state = jnp.stack([to_plane(v), to_plane(refrac_count),
                       to_plane(trace), to_plane(summed)])

    trace_decay = math.exp(-float(dt) / float(tc_trace))
    kernel = functools.partial(
        _if_fused_kernel,
        n_steps=n_steps, dt=float(dt), thresh=float(thresh), reset=float(reset),
        refrac=float(refrac),
        lbound=None if lbound is None else float(lbound),
        trace_decay=float(trace_decay), trace_scale=float(trace_scale),
        traces_additive=bool(traces_additive),
    )

    grid = (n_row_tiles, n_time_blocks)   # time innermost: state stays VMEM-resident
    x_spec = pl.BlockSpec((n_steps, row_tile, cols), lambda i, t: (t, i, 0))
    s_spec = pl.BlockSpec((n_steps, row_tile, cols), lambda i, t: (t, i, 0))
    st_spec = pl.BlockSpec((_N_STATE, row_tile, cols), lambda i, t: (0, i, 0))

    out_shape = (
        jax.ShapeDtypeStruct((T, rows, cols), jnp.int8),           # spikes
        jax.ShapeDtypeStruct((_N_STATE, rows, cols), jnp.float32), # stacked state
    )

    tile_elems = row_tile * cols
    # double-buffered x + spikes per time block, double-buffered state in/out
    buffered = tile_elems * (2 * n_steps * (x_bytes + 1) + 4 * _N_STATE * 4)
    cap_limit = (100 if big_vmem else 44) * _MiB
    vmem_limit = int(min(cap_limit, max(16 * _MiB, buffered + 8 * _MiB)))

    cost = pl.CostEstimate(
        flops=10 * T * padded,
        transcendentals=0,
        bytes_accessed=T * padded * (x_bytes + 1) + 2 * _N_STATE * padded * 4,
    )

    s_raster, state_out = pl.pallas_call(
        kernel,
        out_shape=out_shape,
        grid_spec=pltpu.PrefetchScalarGridSpec(
            num_scalar_prefetch=0,
            grid=grid,
            in_specs=[x_spec, st_spec],
            out_specs=[s_spec, st_spec],
        ),
        compiler_params=pltpu.CompilerParams(
            dimension_semantics=("parallel", "arbitrary"),
            vmem_limit_bytes=vmem_limit,
        ),
        cost_estimate=cost,
        input_output_aliases={1: 1},   # state updated in place in HBM
    )(x2, state)

    # Return path: int8 raster directly (no bool cast); slice padding only if present.
    s_flat = s_raster.reshape(T, padded)
    if pad:
        s_flat = s_flat[:, :total]
    spikes = s_flat.reshape((T,) + state_shape)

    def from_plane(p):
        flat = p.reshape(padded)
        if pad:
            flat = flat[:total]
        return flat.reshape(state_shape)

    return (spikes, from_plane(state_out[0]), from_plane(state_out[1]),
            from_plane(state_out[2]), from_plane(state_out[3]))


def if_nodes_step(x, v, refrac_count, trace, summed, **kwargs):
    """One IFNodes.forward step. Returns (v, s_int8, refrac_count, trace, summed)."""
    spikes, v, rc, tr, summed = if_nodes_run(x[None], v, refrac_count, trace,
                                             summed, **kwargs)
    return v, spikes[0], rc, tr, summed


def _reference_step(x, v, rc, tr, summed, *, dt, thresh, reset, refrac,
                    lbound, tc_trace, trace_scale):
    # pure-JAX reference mirroring the torch semantics (one step)
    trace_decay = jnp.exp(-jnp.float32(dt) / jnp.float32(tc_trace))
    v = v + (rc <= 0.0).astype(v.dtype) * x
    rc = rc - dt
    s = v >= thresh
    rc = jnp.where(s, refrac, rc)
    v = jnp.where(s, reset, v)
    if lbound is not None:
        v = jnp.where(v < lbound, lbound, v)
    tr = tr * trace_decay
    tr = jnp.where(s, trace_scale, tr)
    summed = summed + x
    return v, s, rc, tr, summed


if __name__ == "__main__":
    # module config (deterministic, in-script)
    batch = 2
    shape = (4, 16, 16)          # e.g. a (C, H, W) feature-map layer
    T = 8                        # fused simulation time steps
    dt = 1.0
    thresh = -52.0
    reset = -65.0
    refrac = 5.0
    lbound = -70.0
    tc_trace = 20.0
    trace_scale = 1.0

    key = jax.random.PRNGKey(0)
    kx, krc = jax.random.split(key)

    xs = jax.random.uniform(kx, (T, batch) + shape, jnp.float32, 0.0, 20.0)
    v0 = jnp.full((batch,) + shape, reset, jnp.float32)        # set_batch_size init
    rc0 = jnp.where(jax.random.uniform(krc, (batch,) + shape) < 0.3,
                    3.0, 0.0).astype(jnp.float32)
    tr0 = jnp.zeros((batch,) + shape, jnp.float32)
    sum0 = jnp.zeros((batch,) + shape, jnp.float32)

    run_fn = jax.jit(functools.partial(
        if_nodes_run, dt=dt, thresh=thresh, reset=reset, refrac=refrac,
        lbound=lbound, tc_trace=tc_trace, trace_scale=trace_scale))
    step_fn = jax.jit(functools.partial(
        if_nodes_step, dt=dt, thresh=thresh, reset=reset, refrac=refrac,
        lbound=lbound, tc_trace=tc_trace, trace_scale=trace_scale))

    # ---- fused multi-step kernel ----
    spikes, v_new, rc_new, tr_new, sum_new = run_fn(xs, v0, rc0, tr0, sum0)
    jax.block_until_ready((spikes, v_new, rc_new, tr_new, sum_new))

    # pure-JAX reference: loop the single-step semantics
    v_r, rc_r, tr_r, sum_r = v0, rc0, tr0, sum0
    ref_spikes = []
    for t in range(T):
        v_r, s_r, rc_r, tr_r, sum_r = _reference_step(
            xs[t], v_r, rc_r, tr_r, sum_r,
            dt=dt, thresh=thresh, reset=reset, refrac=refrac,
            lbound=lbound, tc_trace=tc_trace, trace_scale=trace_scale)
        ref_spikes.append(s_r)
    ref_spikes = jnp.stack(ref_spikes)

    assert jnp.array_equal(spikes.astype(jnp.bool_), ref_spikes)
    assert jnp.allclose(v_new, v_r, atol=1e-5)
    assert jnp.allclose(rc_new, rc_r, atol=1e-5)
    assert jnp.allclose(tr_new, tr_r, atol=1e-5)
    assert jnp.allclose(sum_new, sum_r, atol=1e-5)

    # ---- single-step wrapper (original IFNodes.forward signature) ----
    v1, s1, rc1, tr1, sum1 = step_fn(xs[0], v0, rc0, tr0, sum0)
    jax.block_until_ready((v1, s1, rc1, tr1, sum1))
    v1_r, s1_r, rc1_r, tr1_r, sum1_r = _reference_step(
        xs[0], v0, rc0, tr0, sum0,
        dt=dt, thresh=thresh, reset=reset, refrac=refrac,
        lbound=lbound, tc_trace=tc_trace, trace_scale=trace_scale)
    assert jnp.array_equal(s1.astype(jnp.bool_), s1_r)
    assert jnp.allclose(v1, v1_r, atol=1e-5)
    assert jnp.allclose(rc1, rc1_r, atol=1e-5)
    assert jnp.allclose(tr1, tr1_r, atol=1e-5)
    assert jnp.allclose(sum1, sum1_r, atol=1e-5)

    print("KERNEL_OK")
</pallas_src>

<mosaic_0001>
module attributes {stable_mosaic.version = 11 : i64} {
  func.func @_if_fused_kernel(%arg0: i32, %arg1: i32, %arg2: memref<4x32x128xf32, #tpu.memory_space<vmem>>, %arg3: memref<4x32x128xf32, #tpu.memory_space<vmem>>, %arg4: memref<4x32x128xi8, #tpu.memory_space<vmem>>, %arg5: memref<4x32x128xf32, #tpu.memory_space<vmem>>) attributes {dimension_semantics = [#tpu.dimension_semantics<parallel>, #tpu.dimension_semantics<arbitrary>], iteration_bounds = array<i64: 2, 2>, scalar_prefetch = 0 : i64, scratch_operands = 0 : i64, tpu.core_type = #tpu.core_type<tc>, window_params = [{transform_indices = @transform_0, window_bounds = array<i64: 4, 32, 128>}, {transform_indices = @transform_1, window_bounds = array<i64: 4, 32, 128>}, {transform_indices = @transform_2, window_bounds = array<i64: 4, 32, 128>}, {transform_indices = @transform_3, window_bounds = array<i64: 4, 32, 128>}]} {
    %c0_i32 = arith.constant 0 : i32
    %0 = arith.cmpi eq, %arg1, %c0_i32 : i32
    %1 = arith.extui %0 : i1 to i32
    %c0_i32_0 = arith.constant 0 : i32
    %2 = arith.cmpi ne, %1, %c0_i32_0 : i32
    scf.if %2 {
      %c0_152 = arith.constant 0 : index
      %c0_153 = arith.constant 0 : index
      %c0_154 = arith.constant 0 : index
      %187 = vector.load %arg3[%c0_152, %c0_153, %c0_154] : memref<4x32x128xf32, #tpu.memory_space<vmem>>, vector<4x32x128xf32>
      %c0_155 = arith.constant 0 : index
      %c0_156 = arith.constant 0 : index
      %c0_157 = arith.constant 0 : index
      %188 = vector.load %arg5[%c0_155, %c0_156, %c0_157] : memref<4x32x128xf32, #tpu.memory_space<vmem>>, vector<4x32x128xf32>
      tpu.vector_store %arg5[%c0_155, %c0_156, %c0_157], %187 {strides = array<i32>} : memref<4x32x128xf32, #tpu.memory_space<vmem>>, vector<4x32x128xf32>,
    } else {
    }
    %c0 = arith.constant 0 : index
    %c0_1 = arith.constant 0 : index
    %c0_2 = arith.constant 0 : index
    %3 = vector.load %arg2[%c0, %c0_1, %c0_2] : memref<4x32x128xf32, #tpu.memory_space<vmem>>, vector<1x32x128xf32>
    %4 = vector.shape_cast %3 : vector<1x32x128xf32> to vector<32x128xf32>
    %c0_3 = arith.constant 0 : index
    %c0_4 = arith.constant 0 : index
    %c0_5 = arith.constant 0 : index
    %5 = vector.load %arg5[%c0_3, %c0_4, %c0_5] : memref<4x32x128xf32, #tpu.memory_space<vmem>>, vector<1x32x128xf32>
    %6 = vector.shape_cast %5 : vector<1x32x128xf32> to vector<32x128xf32>
    %c1 = arith.constant 1 : index
    %c0_6 = arith.constant 0 : index
    %c0_7 = arith.constant 0 : index
    %7 = vector.load %arg5[%c1, %c0_6, %c0_7] : memref<4x32x128xf32, #tpu.memory_space<vmem>>, vector<1x32x128xf32>
    %8 = vector.shape_cast %7 : vector<1x32x128xf32> to vector<32x128xf32>
    %c2 = arith.constant 2 : index
    %c0_8 = arith.constant 0 : index
    %c0_9 = arith.constant 0 : index
    %9 = vector.load %arg5[%c2, %c0_8, %c0_9] : memref<4x32x128xf32, #tpu.memory_space<vmem>>, vector<1x32x128xf32>
    %10 = vector.shape_cast %9 : vector<1x32x128xf32> to vector<32x128xf32>
    %cst = arith.constant 0.000000e+00 : f32
    %11 = vector.broadcast %cst : f32 to vector<32x128xf32>
    %12 = arith.cmpf ole, %8, %11 : vector<32x128xf32>
    %cst_10 = arith.constant 0.000000e+00 : f32
    %13 = vector.broadcast %cst_10 : f32 to vector<32x128xf32>
    %14 = arith.select %12, %4, %13 : vector<32x128xi1>, vector<32x128xf32>
    %15 = arith.addf %6, %14 : vector<32x128xf32>
    %cst_11 = arith.constant 1.000000e+00 : f32
    %16 = vector.broadcast %cst_11 : f32 to vector<32x128xf32>
    %17 = arith.subf %8, %16 : vector<32x128xf32>
    %cst_12 = arith.constant -5.200000e+01 : f32
    %18 = vector.broadcast %cst_12 : f32 to vector<32x128xf32>
    %19 = arith.cmpf oge, %15, %18 : vector<32x128xf32>
    %cst_13 = arith.constant 5.000000e+00 : f32
    %20 = vector.broadcast %cst_13 : f32 to vector<32x128xf32>
    %21 = arith.select %19, %20, %17 : vector<32x128xi1>, vector<32x128xf32>
    %cst_14 = arith.constant -6.500000e+01 : f32
    %22 = vector.broadcast %cst_14 : f32 to vector<32x128xf32>
    %23 = arith.select %19, %22, %15 : vector<32x128xi1>, vector<32x128xf32>
    %cst_15 = arith.constant -7.000000e+01 : f32
    %24 = vector.broadcast %cst_15 : f32 to vector<32x128xf32>
    %25 = arith.maximumf %23, %24 : vector<32x128xf32>
    %cst_16 = arith.constant 0.951229453 : f32
    %26 = vector.broadcast %cst_16 : f32 to vector<32x128xf32>
    %27 = arith.mulf %10, %26 : vector<32x128xf32>
    %cst_17 = arith.constant 1.000000e+00 : f32
    %28 = vector.broadcast %cst_17 : f32 to vector<32x128xf32>
    %29 = arith.select %19, %28, %27 : vector<32x128xi1>, vector<32x128xf32>
    %c0_18 = arith.constant 0 : index
    %c0_19 = arith.constant 0 : index
    %c0_20 = arith.constant 0 : index
    %30 = vector.load %arg5[%c0_18, %c0_19, %c0_20] : memref<4x32x128xf32, #tpu.memory_space<vmem>>, vector<1x32x128xf32>
    %31 = vector.shape_cast %30 : vector<1x32x128xf32> to vector<32x128xf32>
    %32 = vector.shape_cast %25 : vector<32x128xf32> to vector<1x32x128xf32>
    tpu.vector_store %arg5[%c0_18, %c0_19, %c0_20], %32 {strides = array<i32>} : memref<4x32x128xf32, #tpu.memory_space<vmem>>, vector<1x32x128xf32>,
    %c1_21 = arith.constant 1 : index
    %c0_22 = arith.constant 0 : index
    %c0_23 = arith.constant 0 : index
    %33 = vector.load %arg5[%c1_21, %c0_22, %c0_23] : memref<4x32x128xf32, #tpu.memory_space<vmem>>, vector<1x32x128xf32>
    %34 = vector.shape_cast %33 : vector<1x32x128xf32> to vector<32x128xf32>
    %35 = vector.shape_cast %21 : vector<32x128xf32> to vector<1x32x128xf32>
    tpu.vector_store %arg5[%c1_21, %c0_22, %c0_23], %35 {strides = array<i32>} : memref<4x32x128xf32, #tpu.memory_space<vmem>>, vector<1x32x128xf32>,
    %c2_24 = arith.constant 2 : index
    %c0_25 = arith.constant 0 : index
    %c0_26 = arith.constant 0 : index
    %36 = vector.load %arg5[%c2_24, %c0_25, %c0_26] : memref<4x32x128xf32, #tpu.memory_space<vmem>>, vector<1x32x128xf32>
    %37 = vector.shape_cast %36 : vector<1x32x128xf32> to vector<32x128xf32>
    %38 = vector.shape_cast %29 : vector<32x128xf32> to vector<1x32x128xf32>
    tpu.vector_store %arg5[%c2_24, %c0_25, %c0_26], %38 {strides = array<i32>} : memref<4x32x128xf32, #tpu.memory_space<vmem>>, vector<1x32x128xf32>,
    %c3 = arith.constant 3 : index
    %c0_27 = arith.constant 0 : index
    %c0_28 = arith.constant 0 : index
    %39 = vector.load %arg5[%c3, %c0_27, %c0_28] : memref<4x32x128xf32, #tpu.memory_space<vmem>>, vector<1x32x128xf32>
    %40 = vector.shape_cast %39 : vector<1x32x128xf32> to vector<32x128xf32>
    %41 = arith.addf %40, %4 : vector<32x128xf32>
    %c3_29 = arith.constant 3 : index
    %c0_30 = arith.constant 0 : index
    %c0_31 = arith.constant 0 : index
    %42 = vector.load %arg5[%c3_29, %c0_30, %c0_31] : memref<4x32x128xf32, #tpu.memory_space<vmem>>, vector<1x32x128xf32>
    %43 = vector.shape_cast %42 : vector<1x32x128xf32> to vector<32x128xf32>
    %44 = vector.shape_cast %41 : vector<32x128xf32> to vector<1x32x128xf32>
    tpu.vector_store %arg5[%c3_29, %c0_30, %c0_31], %44 {strides = array<i32>} : memref<4x32x128xf32, #tpu.memory_space<vmem>>, vector<1x32x128xf32>,
    %45 = arith.extui %19 : vector<32x128xi1> to vector<32x128xi8>
    %c0_32 = arith.constant 0 : index
    %c0_33 = arith.constant 0 : index
    %c0_34 = arith.constant 0 : index
    %46 = vector.load %arg4[%c0_32, %c0_33, %c0_34] : memref<4x32x128xi8, #tpu.memory_space<vmem>>, vector<1x32x128xi8>
    %47 = vector.shape_cast %46 : vector<1x32x128xi8> to vector<32x128xi8>
    %48 = vector.shape_cast %45 : vector<32x128xi8> to vector<1x32x128xi8>
    tpu.vector_store %arg4[%c0_32, %c0_33, %c0_34], %48 {strides = array<i32>} : memref<4x32x128xi8, #tpu.memory_space<vmem>>, vector<1x32x128xi8>,
    %c1_35 = arith.constant 1 : index
    %c0_36 = arith.constant 0 : index
    %c0_37 = arith.constant 0 : index
    %49 = vector.load %arg2[%c1_35, %c0_36, %c0_37] : memref<4x32x128xf32, #tpu.memory_space<vmem>>, vector<1x32x128xf32>
    %50 = vector.shape_cast %49 : vector<1x32x128xf32> to vector<32x128xf32>
    %c0_38 = arith.constant 0 : index
    %c0_39 = arith.constant 0 : index
    %c0_40 = arith.constant 0 : index
    %51 = vector.load %arg5[%c0_38, %c0_39, %c0_40] : memref<4x32x128xf32, #tpu.memory_space<vmem>>, vector<1x32x128xf32>
    %52 = vector.shape_cast %51 : vector<1x32x128xf32> to vector<32x128xf32>
    %c1_41 = arith.constant 1 : index
    %c0_42 = arith.constant 0 : index
    %c0_43 = arith.constant 0 : index
    %53 = vector.load %arg5[%c1_41, %c0_42, %c0_43] : memref<4x32x128xf32, #tpu.memory_space<vmem>>, vector<1x32x128xf32>
    %54 = vector.shape_cast %53 : vector<1x32x128xf32> to vector<32x128xf32>
    %c2_44 = arith.constant 2 : index
    %c0_45 = arith.constant 0 : index
    %c0_46 = arith.constant 0 : index
    %55 = vector.load %arg5[%c2_44, %c0_45, %c0_46] : memref<4x32x128xf32, #tpu.memory_space<vmem>>, vector<1x32x128xf32>
    %56 = vector.shape_cast %55 : vector<1x32x128xf32> to vector<32x128xf32>
    %cst_47 = arith.constant 0.000000e+00 : f32
    %57 = vector.broadcast %cst_47 : f32 to vector<32x128xf32>
    %58 = arith.cmpf ole, %54, %57 : vector<32x128xf32>
    %cst_48 = arith.constant 0.000000e+00 : f32
    %59 = vector.broadcast %cst_48 : f32 to vector<32x128xf32>
    %60 = arith.select %58, %50, %59 : vector<32x128xi1>, vector<32x128xf32>
    %61 = arith.addf %52, %60 : vector<32x128xf32>
    %cst_49 = arith.constant 1.000000e+00 : f32
    %62 = vector.broadcast %cst_49 : f32 to vector<32x128xf32>
    %63 = arith.subf %54, %62 : vector<32x128xf32>
    %cst_50 = arith.constant -5.200000e+01 : f32
    %64 = vector.broadcast %cst_50 : f32 to vector<32x128xf32>
    %65 = arith.cmpf oge, %61, %64 : vector<32x128xf32>
    %cst_51 = arith.constant 5.000000e+00 : f32
    %66 = vector.broadcast %cst_51 : f32 to vector<32x128xf32>
    %67 = arith.select %65, %66, %63 : vector<32x128xi1>, vector<32x128xf32>
    %cst_52 = arith.constant -6.500000e+01 : f32
    %68 = vector.broadcast %cst_52 : f32 to vector<32x128xf32>
    %69 = arith.select %65, %68, %61 : vector<32x128xi1>, vector<32x128xf32>
    %cst_53 = arith.constant -7.000000e+01 : f32
    %70 = vector.broadcast %cst_53 : f32 to vector<32x128xf32>
    %71 = arith.maximumf %69, %70 : vector<32x128xf32>
    %cst_54 = arith.constant 0.951229453 : f32
    %72 = vector.broadcast %cst_54 : f32 to vector<32x128xf32>
    %73 = arith.mulf %56, %72 : vector<32x128xf32>
    %cst_55 = arith.constant 1.000000e+00 : f32
    %74 = vector.broadcast %cst_55 : f32 to vector<32x128xf32>
    %75 = arith.select %65, %74, %73 : vector<32x128xi1>, vector<32x128xf32>
    %c0_56 = arith.constant 0 : index
    %c0_57 = arith.constant 0 : index
    %c0_58 = arith.constant 0 : index
    %76 = vector.load %arg5[%c0_56, %c0_57, %c0_58] : memref<4x32x128xf32, #tpu.memory_space<vmem>>, vector<1x32x128xf32>
    %77 = vector.shape_cast %76 : vector<1x32x128xf32> to vector<32x128xf32>
    %78 = vector.shape_cast %71 : vector<32x128xf32> to vector<1x32x128xf32>
    tpu.vector_store %arg5[%c0_56, %c0_57, %c0_58], %78 {strides = array<i32>} : memref<4x32x128xf32, #tpu.memory_space<vmem>>, vector<1x32x128xf32>,
    %c1_59 = arith.constant 1 : index
    %c0_60 = arith.constant 0 : index
    %c0_61 = arith.constant 0 : index
    %79 = vector.load %arg5[%c1_59, %c0_60, %c0_61] : memref<4x32x128xf32, #tpu.memory_space<vmem>>, vector<1x32x128xf32>
    %80 = vector.shape_cast %79 : vector<1x32x128xf32> to vector<32x128xf32>
    %81 = vector.shape_cast %67 : vector<32x128xf32> to vector<1x32x128xf32>
    tpu.vector_store %arg5[%c1_59, %c0_60, %c0_61], %81 {strides = array<i32>} : memref<4x32x128xf32, #tpu.memory_space<vmem>>, vector<1x32x128xf32>,
    %c2_62 = arith.constant 2 : index
    %c0_63 = arith.constant 0 : index
    %c0_64 = arith.constant 0 : index
    %82 = vector.load %arg5[%c2_62, %c0_63, %c0_64] : memref<4x32x128xf32, #tpu.memory_space<vmem>>, vector<1x32x128xf32>
    %83 = vector.shape_cast %82 : vector<1x32x128xf32> to vector<32x128xf32>
    %84 = vector.shape_cast %75 : vector<32x128xf32> to vector<1x32x128xf32>
    tpu.vector_store %arg5[%c2_62, %c0_63, %c0_64], %84 {strides = array<i32>} : memref<4x32x128xf32, #tpu.memory_space<vmem>>, vector<1x32x128xf32>,
    %c3_65 = arith.constant 3 : index
    %c0_66 = arith.constant 0 : index
    %c0_67 = arith.constant 0 : index
    %85 = vector.load %arg5[%c3_65, %c0_66, %c0_67] : memref<4x32x128xf32, #tpu.memory_space<vmem>>, vector<1x32x128xf32>
    %86 = vector.shape_cast %85 : vector<1x32x128xf32> to vector<32x128xf32>
    %87 = arith.addf %86, %50 : vector<32x128xf32>
    %c3_68 = arith.constant 3 : index
    %c0_69 = arith.constant 0 : index
    %c0_70 = arith.constant 0 : index
    %88 = vector.load %arg5[%c3_68, %c0_69, %c0_70] : memref<4x32x128xf32, #tpu.memory_space<vmem>>, vector<1x32x128xf32>
    %89 = vector.shape_cast %88 : vector<1x32x128xf32> to vector<32x128xf32>
    %90 = vector.shape_cast %87 : vector<32x128xf32> to vector<1x32x128xf32>
    tpu.vector_store %arg5[%c3_68, %c0_69, %c0_70], %90 {strides = array<i32>} : memref<4x32x128xf32, #tpu.memory_space<vmem>>, vector<1x32x128xf32>,
    %91 = arith.extui %65 : vector<32x128xi1> to vector<32x128xi8>
    %c1_71 = arith.constant 1 : index
    %c0_72 = arith.constant 0 : index
    %c0_73 = arith.constant 0 : index
    %92 = vector.load %arg4[%c1_71, %c0_72, %c0_73] : memref<4x32x128xi8, #tpu.memory_space<vmem>>, vector<1x32x128xi8>
    %93 = vector.shape_cast %92 : vector<1x32x128xi8> to vector<32x128xi8>
    %94 = vector.shape_cast %91 : vector<32x128xi8> to vector<1x32x128xi8>
    tpu.vector_store %arg4[%c1_71, %c0_72, %c0_73], %94 {strides = array<i32>} : memref<4x32x128xi8, #tpu.memory_space<vmem>>, vector<1x32x128xi8>,
    %c2_74 = arith.constant 2 : index
    %c0_75 = arith.constant 0 : index
    %c0_76 = arith.constant 0 : index
    %95 = vector.load %arg2[%c2_74, %c0_75, %c0_76] : memref<4x32x128xf32, #tpu.memory_space<vmem>>, vector<1x32x128xf32>
    %96 = vector.shape_cast %95 : vector<1x32x128xf32> to vector<32x128xf32>
    %c0_77 = arith.constant 0 : index
    %c0_78 = arith.constant 0 : index
    %c0_79 = arith.constant 0 : index
    %97 = vector.load %arg5[%c0_77, %c0_78, %c0_79] : memref<4x32x128xf32, #tpu.memory_space<vmem>>, vector<1x32x128xf32>
    %98 = vector.shape_cast %97 : vector<1x32x128xf32> to vector<32x128xf32>
    %c1_80 = arith.constant 1 : index
    %c0_81 = arith.constant 0 : index
    %c0_82 = arith.constant 0 : index
    %99 = vector.load %arg5[%c1_80, %c0_81, %c0_82] : memref<4x32x128xf32, #tpu.memory_space<vmem>>, vector<1x32x128xf32>
    %100 = vector.shape_cast %99 : vector<1x32x128xf32> to vector<32x128xf32>
    %c2_83 = arith.constant 2 : index
    %c0_84 = arith.constant 0 : index
    %c0_85 = arith.constant 0 : index
    %101 = vector.load %arg5[%c2_83, %c0_84, %c0_85] : memref<4x32x128xf32, #tpu.memory_space<vmem>>, vector<1x32x128xf32>
    %102 = vector.shape_cast %101 : vector<1x32x128xf32> to vector<32x128xf32>
    %cst_86 = arith.constant 0.000000e+00 : f32
    %103 = vector.broadcast %cst_86 : f32 to vector<32x128xf32>
    %104 = arith.cmpf ole, %100, %103 : vector<32x128xf32>
    %cst_87 = arith.constant 0.000000e+00 : f32
    %105 = vector.broadcast %cst_87 : f32 to vector<32x128xf32>
    %106 = arith.select %104, %96, %105 : vector<32x128xi1>, vector<32x128xf32>
    %107 = arith.addf %98, %106 : vector<32x128xf32>
    %cst_88 = arith.constant 1.000000e+00 : f32
    %108 = vector.broadcast %cst_88 : f32 to vector<32x128xf32>
    %109 = arith.subf %100, %108 : vector<32x128xf32>
    %cst_89 = arith.constant -5.200000e+01 : f32
    %110 = vector.broadcast %cst_89 : f32 to vector<32x128xf32>
    %111 = arith.cmpf oge, %107, %110 : vector<32x128xf32>
    %cst_90 = arith.constant 5.000000e+00 : f32
    %112 = vector.broadcast %cst_90 : f32 to vector<32x128xf32>
    %113 = arith.select %111, %112, %109 : vector<32x128xi1>, vector<32x128xf32>
    %cst_91 = arith.constant -6.500000e+01 : f32
    %114 = vector.broadcast %cst_91 : f32 to vector<32x128xf32>
    %115 = arith.select %111, %114, %107 : vector<32x128xi1>, vector<32x128xf32>
    %cst_92 = arith.constant -7.000000e+01 : f32
    %116 = vector.broadcast %cst_92 : f32 to vector<32x128xf32>
    %117 = arith.maximumf %115, %116 : vector<32x128xf32>
    %cst_93 = arith.constant 0.951229453 : f32
    %118 = vector.broadcast %cst_93 : f32 to vector<32x128xf32>
    %119 = arith.mulf %102, %118 : vector<32x128xf32>
    %cst_94 = arith.constant 1.000000e+00 : f32
    %120 = vector.broadcast %cst_94 : f32 to vector<32x128xf32>
    %121 = arith.select %111, %120, %119 : vector<32x128xi1>, vector<32x128xf32>
    %c0_95 = arith.constant 0 : index
    %c0_96 = arith.constant 0 : index
    %c0_97 = arith.constant 0 : index
    %122 = vector.load %arg5[%c0_95, %c0_96, %c0_97] : memref<4x32x128xf32, #tpu.memory_space<vmem>>, vector<1x32x128xf32>
    %123 = vector.shape_cast %122 : vector<1x32x128xf32> to vector<32x128xf32>
    %124 = vector.shape_cast %117 : vector<32x128xf32> to vector<1x32x128xf32>
    tpu.vector_store %arg5[%c0_95, %c0_96, %c0_97], %124 {strides = array<i32>} : memref<4x32x128xf32, #tpu.memory_space<vmem>>, vector<1x32x128xf32>,
    %c1_98 = arith.constant 1 : index
    %c0_99 = arith.constant 0 : index
    %c0_100 = arith.constant 0 : index
    %125 = vector.load %arg5[%c1_98, %c0_99, %c0_100] : memref<4x32x128xf32, #tpu.memory_space<vmem>>, vector<1x32x128xf32>
    %126 = vector.shape_cast %125 : vector<1x32x128xf32> to vector<32x128xf32>
    %127 = vector.shape_cast %113 : vector<32x128xf32> to vector<1x32x128xf32>
    tpu.vector_store %arg5[%c1_98, %c0_99, %c0_100], %127 {strides = array<i32>} : memref<4x32x128xf32, #tpu.memory_space<vmem>>, vector<1x32x128xf32>,
    %c2_101 = arith.constant 2 : index
    %c0_102 = arith.constant 0 : index
    %c0_103 = arith.constant 0 : index
    %128 = vector.load %arg5[%c2_101, %c0_102, %c0_103] : memref<4x32x128xf32, #tpu.memory_space<vmem>>, vector<1x32x128xf32>
    %129 = vector.shape_cast %128 : vector<1x32x128xf32> to vector<32x128xf32>
    %130 = vector.shape_cast %121 : vector<32x128xf32> to vector<1x32x128xf32>
    tpu.vector_store %arg5[%c2_101, %c0_102, %c0_103], %130 {strides = array<i32>} : memref<4x32x128xf32, #tpu.memory_space<vmem>>, vector<1x32x128xf32>,
    %c3_104 = arith.constant 3 : index
    %c0_105 = arith.constant 0 : index
    %c0_106 = arith.constant 0 : index
    %131 = vector.load %arg5[%c3_104, %c0_105, %c0_106] : memref<4x32x128xf32, #tpu.memory_space<vmem>>, vector<1x32x128xf32>
    %132 = vector.shape_cast %131 : vector<1x32x128xf32> to vector<32x128xf32>
    %133 = arith.addf %132, %96 : vector<32x128xf32>
    %c3_107 = arith.constant 3 : index
    %c0_108 = arith.constant 0 : index
    %c0_109 = arith.constant 0 : index
    %134 = vector.load %arg5[%c3_107, %c0_108, %c0_109] : memref<4x32x128xf32, #tpu.memory_space<vmem>>, vector<1x32x128xf32>
    %135 = vector.shape_cast %134 : vector<1x32x128xf32> to vector<32x128xf32>
    %136 = vector.shape_cast %133 : vector<32x128xf32> to vector<1x32x128xf32>
    tpu.vector_store %arg5[%c3_107, %c0_108, %c0_109], %136 {strides = array<i32>} : memref<4x32x128xf32, #tpu.memory_space<vmem>>, vector<1x32x128xf32>,
    %137 = arith.extui %111 : vector<32x128xi1> to vector<32x128xi8>
    %c2_110 = arith.constant 2 : index
    %c0_111 = arith.constant 0 : index
    %c0_112 = arith.constant 0 : index
    %138 = vector.load %arg4[%c2_110, %c0_111, %c0_112] : memref<4x32x128xi8, #tpu.memory_space<vmem>>, vector<1x32x128xi8>
    %139 = vector.shape_cast %138 : vector<1x32x128xi8> to vector<32x128xi8>
    %140 = vector.shape_cast %137 : vector<32x128xi8> to vector<1x32x128xi8>
    tpu.vector_store %arg4[%c2_110, %c0_111, %c0_112], %140 {strides = array<i32>} : memref<4x32x128xi8, #tpu.memory_space<vmem>>, vector<1x32x128xi8>,
    %c3_113 = arith.constant 3 : index
    %c0_114 = arith.constant 0 : index
    %c0_115 = arith.constant 0 : index
    %141 = vector.load %arg2[%c3_113, %c0_114, %c0_115] : memref<4x32x128xf32, #tpu.memory_space<vmem>>, vector<1x32x128xf32>
    %142 = vector.shape_cast %141 : vector<1x32x128xf32> to vector<32x128xf32>
    %c0_116 = arith.constant 0 : index
    %c0_117 = arith.constant 0 : index
    %c0_118 = arith.constant 0 : index
    %143 = vector.load %arg5[%c0_116, %c0_117, %c0_118] : memref<4x32x128xf32, #tpu.memory_space<vmem>>, vector<1x32x128xf32>
    %144 = vector.shape_cast %143 : vector<1x32x128xf32> to vector<32x128xf32>
    %c1_119 = arith.constant 1 : index
    %c0_120 = arith.constant 0 : index
    %c0_121 = arith.constant 0 : index
    %145 = vector.load %arg5[%c1_119, %c0_120, %c0_121] : memref<4x32x128xf32, #tpu.memory_space<vmem>>, vector<1x32x128xf32>
    %146 = vector.shape_cast %145 : vector<1x32x128xf32> to vector<32x128xf32>
    %c2_122 = arith.constant 2 : index
    %c0_123 = arith.constant 0 : index
    %c0_124 = arith.constant 0 : index
    %147 = vector.load %arg5[%c2_122, %c0_123, %c0_124] : memref<4x32x128xf32, #tpu.memory_space<vmem>>, vector<1x32x128xf32>
    %148 = vector.shape_cast %147 : vector<1x32x128xf32> to vector<32x128xf32>
    %cst_125 = arith.constant 0.000000e+00 : f32
    %149 = vector.broadcast %cst_125 : f32 to vector<32x128xf32>
    %150 = arith.cmpf ole, %146, %149 : vector<32x128xf32>
    %cst_126 = arith.constant 0.000000e+00 : f32
    %151 = vector.broadcast %cst_126 : f32 to vector<32x128xf32>
    %152 = arith.select %150, %142, %151 : vector<32x128xi1>, vector<32x128xf32>
    %153 = arith.addf %144, %152 : vector<32x128xf32>
    %cst_127 = arith.constant 1.000000e+00 : f32
    %154 = vector.broadcast %cst_127 : f32 to vector<32x128xf32>
    %155 = arith.subf %146, %154 : vector<32x128xf32>
    %cst_128 = arith.constant -5.200000e+01 : f32
    %156 = vector.broadcast %cst_128 : f32 to vector<32x128xf32>
    %157 = arith.cmpf oge, %153, %156 : vector<32x128xf32>
    %cst_129 = arith.constant 5.000000e+00 : f32
    %158 = vector.broadcast %cst_129 : f32 to vector<32x128xf32>
    %159 = arith.select %157, %158, %155 : vector<32x128xi1>, vector<32x128xf32>
    %cst_130 = arith.constant -6.500000e+01 : f32
    %160 = vector.broadcast %cst_130 : f32 to vector<32x128xf32>
    %161 = arith.select %157, %160, %153 : vector<32x128xi1>, vector<32x128xf32>
    %cst_131 = arith.constant -7.000000e+01 : f32
    %162 = vector.broadcast %cst_131 : f32 to vector<32x128xf32>
    %163 = arith.maximumf %161, %162 : vector<32x128xf32>
    %cst_132 = arith.constant 0.951229453 : f32
    %164 = vector.broadcast %cst_132 : f32 to vector<32x128xf32>
    %165 = arith.mulf %148, %164 : vector<32x128xf32>
    %cst_133 = arith.constant 1.000000e+00 : f32
    %166 = vector.broadcast %cst_133 : f32 to vector<32x128xf32>
    %167 = arith.select %157, %166, %165 : vector<32x128xi1>, vector<32x128xf32>
    %c0_134 = arith.constant 0 : index
    %c0_135 = arith.constant 0 : index
    %c0_136 = arith.constant 0 : index
    %168 = vector.load %arg5[%c0_134, %c0_135, %c0_136] : memref<4x32x128xf32, #tpu.memory_space<vmem>>, vector<1x32x128xf32>
    %169 = vector.shape_cast %168 : vector<1x32x128xf32> to vector<32x128xf32>
    %170 = vector.shape_cast %163 : vector<32x128xf32> to vector<1x32x128xf32>
    tpu.vector_store %arg5[%c0_134, %c0_135, %c0_136], %170 {strides = array<i32>} : memref<4x32x128xf32, #tpu.memory_space<vmem>>, vector<1x32x128xf32>,
    %c1_137 = arith.constant 1 : index
    %c0_138 = arith.constant 0 : index
    %c0_139 = arith.constant 0 : index
    %171 = vector.load %arg5[%c1_137, %c0_138, %c0_139] : memref<4x32x128xf32, #tpu.memory_space<vmem>>, vector<1x32x128xf32>
    %172 = vector.shape_cast %171 : vector<1x32x128xf32> to vector<32x128xf32>
    %173 = vector.shape_cast %159 : vector<32x128xf32> to vector<1x32x128xf32>
    tpu.vector_store %arg5[%c1_137, %c0_138, %c0_139], %173 {strides = array<i32>} : memref<4x32x128xf32, #tpu.memory_space<vmem>>, vector<1x32x128xf32>,
    %c2_140 = arith.constant 2 : index
    %c0_141 = arith.constant 0 : index
    %c0_142 = arith.constant 0 : index
    %174 = vector.load %arg5[%c2_140, %c0_141, %c0_142] : memref<4x32x128xf32, #tpu.memory_space<vmem>>, vector<1x32x128xf32>
    %175 = vector.shape_cast %174 : vector<1x32x128xf32> to vector<32x128xf32>
    %176 = vector.shape_cast %167 : vector<32x128xf32> to vector<1x32x128xf32>
    tpu.vector_store %arg5[%c2_140, %c0_141, %c0_142], %176 {strides = array<i32>} : memref<4x32x128xf32, #tpu.memory_space<vmem>>, vector<1x32x128xf32>,
    %c3_143 = arith.constant 3 : index
    %c0_144 = arith.constant 0 : index
    %c0_145 = arith.constant 0 : index
    %177 = vector.load %arg5[%c3_143, %c0_144, %c0_145] : memref<4x32x128xf32, #tpu.memory_space<vmem>>, vector<1x32x128xf32>
    %178 = vector.shape_cast %177 : vector<1x32x128xf32> to vector<32x128xf32>
    %179 = arith.addf %178, %142 : vector<32x128xf32>
    %c3_146 = arith.constant 3 : index
    %c0_147 = arith.constant 0 : index
    %c0_148 = arith.constant 0 : index
    %180 = vector.load %arg5[%c3_146, %c0_147, %c0_148] : memref<4x32x128xf32, #tpu.memory_space<vmem>>, vector<1x32x128xf32>
    %181 = vector.shape_cast %180 : vector<1x32x128xf32> to vector<32x128xf32>
    %182 = vector.shape_cast %179 : vector<32x128xf32> to vector<1x32x128xf32>
    tpu.vector_store %arg5[%c3_146, %c0_147, %c0_148], %182 {strides = array<i32>} : memref<4x32x128xf32, #tpu.memory_space<vmem>>, vector<1x32x128xf32>,
    %183 = arith.extui %157 : vector<32x128xi1> to vector<32x128xi8>
    %c3_149 = arith.constant 3 : index
    %c0_150 = arith.constant 0 : index
    %c0_151 = arith.constant 0 : index
    %184 = vector.load %arg4[%c3_149, %c0_150, %c0_151] : memref<4x32x128xi8, #tpu.memory_space<vmem>>, vector<1x32x128xi8>
    %185 = vector.shape_cast %184 : vector<1x32x128xi8> to vector<32x128xi8>
    %186 = vector.shape_cast %183 : vector<32x128xi8> to vector<1x32x128xi8>
    tpu.vector_store %arg4[%c3_149, %c0_150, %c0_151], %186 {strides = array<i32>} : memref<4x32x128xi8, #tpu.memory_space<vmem>>, vector<1x32x128xi8>,
    return
  }
  func.func @transform_0(%arg0: i32, %arg1: i32) -> (i32, i32, i32) {
    %c0_i32 = arith.constant 0 : i32
    %c0_i32_0 = arith.constant 0 : i32
    return %arg1, %arg0, %c0_i32 : i32, i32, i32
  }
  func.func @transform_1(%arg0: i32, %arg1: i32) -> (i32, i32, i32) {
    %c0_i32 = arith.constant 0 : i32
    %c0_i32_0 = arith.constant 0 : i32
    %c0_i32_1 = arith.constant 0 : i32
    return %c0_i32, %arg0, %c0_i32_0 : i32, i32, i32
  }
  func.func @transform_2(%arg0: i32, %arg1: i32) -> (i32, i32, i32) {
    %c0_i32 = arith.constant 0 : i32
    %c0_i32_0 = arith.constant 0 : i32
    return %arg1, %arg0, %c0_i32 : i32, i32, i32
  }
  func.func @transform_3(%arg0: i32, %arg1: i32) -> (i32, i32, i32) {
    %c0_i32 = arith.constant 0 : i32
    %c0_i32_0 = arith.constant 0 : i32
    %c0_i32_1 = arith.constant 0 : i32
    return %c0_i32, %arg0, %c0_i32_0 : i32, i32, i32
  }
}

</mosaic_0001>

<llo_original>
// kernel: if_nodes_run.1
$region0: #{if_nodes_run.1}
  #allocation0 [shape = 'u32[]', space=smem, size = 0x4, offset = 0x4, fixed_abs, tag = 'smem constant byte address 0x4 - core index']
  #allocation1 [shape = 'u32[72,128]{1,0:T(1,128)}', space=vmem, size = 0x9000, scoped, tag = 'internal scratch']
  %s0 = inlined_call_operand.vmem [shape: f32[8,64,128], index: 0, kind: input, shape index: {}]
  %s1 = inlined_call_operand.vmem [shape: f32[4,64,128], index: 1, kind: input, shape index: {}, may-alias: {1,3}]
  %s2 = inlined_call_operand.vmem [shape: s8[8,64,128], index: 2, kind: output, shape index: {0}]
  %s3 = inlined_call_operand.vmem [shape: f32[4,64,128], index: 3, kind: output, shape index: {1}, may-alias: {1,3}]
  %4 = xla_tuple %s2, %s3
  %s5 = sld [smem:[#allocation0]]
  $region200: #{if_nodes_run.1} parent=0
    _
  %s7 = ssub.s32 1, %s5
  %s8 = scalar_select 0, %s7, %s5
  $region1: #{if_nodes_run.1} parent=0
    #allocation2 [shape = 'u8[131072]{0}', space=vmem, size = 0x20000, scoped, tag = 'input window, operand 0']
    #allocation3 [shape = 'u8[131072]{0}', space=vmem, size = 0x20000, scoped, tag = 'input window, operand 1']
    #allocation4 [shape = 'u8[32768]{0}', space=vmem, size = 0x8000, scoped, tag = 'output window, operand 0']
    #allocation5 [shape = 'u8[131072]{0}', space=vmem, size = 0x20000, scoped, tag = 'output window, operand 1']
    loop: start=0, step=1, limit=6
    $region2: #{if_nodes_run.1} parent=1 // loop_pre_header
      _
    $region3: #{if_nodes_run.1} parent=1 // loop_header
      %s10 = sphi 0, %s14
      %p11 = scmp.ge.s32.totalorder %s10, 6
      %s17 = sphi 0, %s29
      %s18 = sphi 0, %s25
      %s19 = sphi 0, %s17
      %s20 = sphi 0, %s18
      %s21 = sphi 0, %s19
      %s22 = sphi 0, %s20
      %s34 = sphi 0, %s36
      %s37 = sphi 0, %s34
      %s38 = sphi 0, %s37
      %s54 = sphi 0, %s38
      %s60 = sphi 0, %s62
      %s63 = sphi 0, %s60
      %s64 = sphi 0, %s63
      %s80 = sphi 0, %s64
      %s88 = sphi 0, %s90
      %s91 = sphi 0, %s88
      %s92 = sphi 0, %s91
      %s108 = sphi 0, %s92
      %s114 = sphi 0, %s116
      %s117 = sphi 0, %s114
      %s118 = sphi 0, %s117
      %s134 = sphi 0, %s118
    $region4: #{if_nodes_run.1} parent=1 // loop_header_branch
      %13 = sbr.rel (%p11) target = $region8
    $region5: #{if_nodes_run.1} parent=1 // loop_body
      %s15 = ssub.s32 %s10, 1
      %s16 = ssub.s32 %s10, 2
      %s23 = sadd.s32 1, %s18
      %p24 = scmp.ge.s32.totalorder %s23, 2
      %s25 = scalar_select %p24, 0, %s23
      %s26 = sadd.s32 1, %s17
      %s27 = scalar_select %p24, %s26, %s17
      %p28 = scmp.ge.s32.totalorder %s27, 2
      %s29 = scalar_select %p28, 0, %s27
      %s30 = ssub.s32 %s18, %s25
      %s31 = ssub.s32 %s17, %s29
      %s32 = sor.u32 %s30, %s31
      %p33 = scmp.eq.s32.totalorder %s32, 0
      %s35 = sadd.s32 %s34, 1
      %s36 = scalar_select %p33, %s34, %s35
      %p39 = pneg %p33
      %p40 = scmp.eq.s32.totalorder %s10, 3
      %p41 = por %p39, %p40
      %p42 = scmp.ne.s32.totalorder %s34, %s37
      %p43 = scmp.eq.s32.totalorder %s10, 0
      %p44 = por %p42, %p43
      %p45 = scmp.ne.s32.totalorder %s34, %s37
      %p46 = scmp.eq.s32.totalorder %s15, 3
      %p47 = por %p45, %p46
      %p48 = scmp.ne.s32.totalorder %s37, %s38
      %p49 = scmp.eq.s32.totalorder %s15, 0
      %p50 = por %p48, %p49
      %p51 = scmp.ne.s32.totalorder %s37, %s38
      %p52 = scmp.eq.s32.totalorder %s16, 3
      %p53 = por %p51, %p52
      %p55 = scmp.ne.s32.totalorder %s38, %s54
      %p56 = scmp.eq.s32.totalorder %s16, 0
      %p57 = por %p55, %p56
      %s58 = ssub.s32 %s17, %s29
      %p59 = scmp.eq.s32.totalorder %s58, 0
      %s61 = sadd.s32 %s60, 1
      %s62 = scalar_select %p59, %s60, %s61
      %p65 = pneg %p59
      %p66 = scmp.eq.s32.totalorder %s10, 3
      %p67 = por %p65, %p66
      %p68 = scmp.ne.s32.totalorder %s60, %s63
      %p69 = scmp.eq.s32.totalorder %s10, 0
      %p70 = por %p68, %p69
      %p71 = scmp.ne.s32.totalorder %s60, %s63
      %p72 = scmp.eq.s32.totalorder %s15, 3
      %p73 = por %p71, %p72
      %p74 = scmp.ne.s32.totalorder %s63, %s64
      %p75 = scmp.eq.s32.totalorder %s15, 0
      %p76 = por %p74, %p75
      %p77 = scmp.ne.s32.totalorder %s63, %s64
      %p78 = scmp.eq.s32.totalorder %s16, 3
      %p79 = por %p77, %p78
      %p81 = scmp.ne.s32.totalorder %s64, %s80
      %p82 = scmp.eq.s32.totalorder %s16, 0
      %p83 = por %p81, %p82
      %s84 = ssub.s32 %s18, %s25
      %s85 = ssub.s32 %s17, %s29
      %s86 = sor.u32 %s84, %s85
      %p87 = scmp.eq.s32.totalorder %s86, 0
      %s89 = sadd.s32 %s88, 1
      %s90 = scalar_select %p87, %s88, %s89
      %p93 = pneg %p87
      %p94 = scmp.eq.s32.totalorder %s10, 3
      %p95 = por %p93, %p94
      %p96 = scmp.ne.s32.totalorder %s88, %s91
      %p97 = scmp.eq.s32.totalorder %s10, 0
      %p98 = por %p96, %p97
      %p99 = scmp.ne.s32.totalorder %s88, %s91
      %p100 = scmp.eq.s32.totalorder %s15, 3
      %p101 = por %p99, %p100
      %p102 = scmp.ne.s32.totalorder %s91, %s92
      %p103 = scmp.eq.s32.totalorder %s15, 0
      %p104 = por %p102, %p103
      %p105 = scmp.ne.s32.totalorder %s91, %s92
      %p106 = scmp.eq.s32.totalorder %s16, 3
      %p107 = por %p105, %p106
      %p109 = scmp.ne.s32.totalorder %s92, %s108
      %p110 = scmp.eq.s32.totalorder %s16, 0
      %p111 = por %p109, %p110
      %s112 = ssub.s32 %s17, %s29
      %p113 = scmp.eq.s32.totalorder %s112, 0
      %s115 = sadd.s32 %s114, 1
      %s116 = scalar_select %p113, %s114, %s115
      %p119 = pneg %p113
      %p120 = scmp.eq.s32.totalorder %s10, 3
      %p121 = por %p119, %p120
      %p122 = scmp.ne.s32.totalorder %s114, %s117
      %p123 = scmp.eq.s32.totalorder %s10, 0
      %p124 = por %p122, %p123
      %p125 = scmp.ne.s32.totalorder %s114, %s117
      %p126 = scmp.eq.s32.totalorder %s15, 3
      %p127 = por %p125, %p126
      %p128 = scmp.ne.s32.totalorder %s117, %s118
      %p129 = scmp.eq.s32.totalorder %s15, 0
      %p130 = por %p128, %p129
      %p131 = scmp.ne.s32.totalorder %s117, %s118
      %p132 = scmp.eq.s32.totalorder %s16, 3
      %p133 = por %p131, %p132
      %p135 = scmp.ne.s32.totalorder %s118, %s134
      %p136 = scmp.eq.s32.totalorder %s16, 0
      %p137 = por %p135, %p136
      %p138 = scmp.le.s32.totalorder 1, %s10
      %p139 = scmp.lt.s32.totalorder %s10, 5
      %p140 = pnand %p138, %p139
      %p141 = pneg %p140
      // Predicated region
      $region9: #{if_nodes_run.1} parent=5 // pred_check
        _
      $region10: #{if_nodes_run.1} parent=5 // pred_check_branch
        %143 = sbr.rel (%p140) target = $region12
      $region11: #{if_nodes_run.1} parent=5 // pred_region
        %s144 = ssub.s32 %s10, 1
      $region12: #{if_nodes_run.1} parent=5 // pred_fallthru
        _
      %p145 = scmp.lt.s32.totalorder %s10, 4
      // Predicated region
      $region13: #{if_nodes_run.1} parent=5 // pred_check
        %p146 = pneg %p145
      $region14: #{if_nodes_run.1} parent=5 // pred_check_branch
        %148 = sbr.rel (%p146) target = $region16
      $region15: #{if_nodes_run.1} parent=5 // pred_region
        // Predicated region
        $region17: #{if_nodes_run.1} parent=15 // pred_check
          %p149 = pneg %p44
        $region18: #{if_nodes_run.1} parent=15 // pred_check_branch
          %151 = sbr.rel (%p149) target = $region20
        $region19: #{if_nodes_run.1} parent=15 // pred_region
          %s152 = sand.u32 %s34, 1
          %s153 = sand.u32 %s34, 1
          %s154 = smul.addr %s153, 128
          %s155 = scalar_lea.vmem [#allocation2], %s154
          %s156 = smul.u32 4, %s18
          %s157 = smul.u32 4, %s17
          %s158 = smul.addr %s156, 8
          %s159 = sadd.s32 %s157, %s158
          %s160 = smul.addr %s159, 8
          %s161 = scalar_lea.vmem %s0, %s160
          // Predicated region
          $region21: #{if_nodes_run.1} parent=19 // pred_check
            _
          $region22: #{if_nodes_run.1} parent=19 // pred_check_branch
            %163 = sbr.rel (0) target = $region24
          $region23: #{if_nodes_run.1} parent=19 // pred_region
            // Predicated region
            $region25: #{if_nodes_run.1} parent=23 // pred_check
              _
            $region26: #{if_nodes_run.1} parent=23 // pred_check_branch
              %165 = sbr.rel (0) target = $region28
            $region27: #{if_nodes_run.1} parent=23 // pred_region
              // Predicated region
              $region40: #{if_nodes_run.1} parent=27 // pred_check
                _
              $region41: #{if_nodes_run.1} parent=27 // pred_check_branch
                %211 = sbr.rel (0) target = $region43
              $region42: #{if_nodes_run.1} parent=27 // pred_region
                loop: start=0, step=1, limit=1
                $region44: #{if_nodes_run.1} parent=42 // loop_pre_header
                  _
                $region45: #{if_nodes_run.1} parent=42 // loop_header
                  %s213 = sphi 0, %s217
                  %p214 = scmp.ge.s32.totalorder %s213, 1
                  %s218 = sphi %s161, %s161
                  %s219 = sphi %s155, %s155
                $region46: #{if_nodes_run.1} parent=42 // loop_header_branch
                  %216 = sbr.rel (%p214) target = $region50
                $region47: #{if_nodes_run.1} parent=42 // loop_body
                  %v220 = vld [vmem:[%s218] sm:$0xff]
                  %221 = vst [vmem:[%s219] sm:$0xff] %v220
                  %v222 = vld [vmem:[%s218 + $0x8] sm:$0xff]
                  %223 = vst [vmem:[%s219 + $0x8] sm:$0xff] %v222
                  %v224 = vld [vmem:[%s218 + $0x10] sm:$0xff]
                  %225 = vst [vmem:[%s219 + $0x10] sm:$0xff] %v224
                  %v226 = vld [vmem:[%s218 + $0x18] sm:$0xff]
                  %227 = vst [vmem:[%s219 + $0x18] sm:$0xff] %v226
                  %v228 = vld [vmem:[%s218 + $0x40] sm:$0xff]
                  %229 = vst [vmem:[%s219 + $0x20] sm:$0xff] %v228
                  %v230 = vld [vmem:[%s218 + $0x48] sm:$0xff]
                  %231 = vst [vmem:[%s219 + $0x28] sm:$0xff] %v230
                  %v232 = vld [vmem:[%s218 + $0x50] sm:$0xff]
                  %233 = vst [vmem:[%s219 + $0x30] sm:$0xff] %v232
                  %v234 = vld [vmem:[%s218 + $0x58] sm:$0xff]
                  %235 = vst [vmem:[%s219 + $0x38] sm:$0xff] %v234
                  %v236 = vld [vmem:[%s218 + $0x80] sm:$0xff]
                  %237 = vst [vmem:[%s219 + $0x40] sm:$0xff] %v236
                  %v238 = vld [vmem:[%s218 + $0x88] sm:$0xff]
                  %239 = vst [vmem:[%s219 + $0x48] sm:$0xff] %v238
                  %v240 = vld [vmem:[%s218 + $0x90] sm:$0xff]
                  %241 = vst [vmem:[%s219 + $0x50] sm:$0xff] %v240
                  %v242 = vld [vmem:[%s218 + $0x98] sm:$0xff]
                  %243 = vst [vmem:[%s219 + $0x58] sm:$0xff] %v242
                  %v244 = vld [vmem:[%s218 + $0xc0] sm:$0xff]
                  %245 = vst [vmem:[%s219 + $0x60] sm:$0xff] %v244
                  %v246 = vld [vmem:[%s218 + $0xc8] sm:$0xff]
                  %247 = vst [vmem:[%s219 + $0x68] sm:$0xff] %v246
                  %v248 = vld [vmem:[%s218 + $0xd0] sm:$0xff]
                  %249 = vst [vmem:[%s219 + $0x70] sm:$0xff] %v248
                  %v250 = vld [vmem:[%s218 + $0xd8] sm:$0xff]
                  %251 = vst [vmem:[%s219 + $0x78] sm:$0xff] %v250
                $region48: #{if_nodes_run.1} parent=42 // loop_footer
                  %s217 = sadd.s32 1, %s213
                $region49: #{if_nodes_run.1} parent=42 // loop_footer_branch
                  %212 = sbr.rel target = $region45
                $region50: #{if_nodes_run.1} parent=42 // loop_exit
                  _
              $region43: #{if_nodes_run.1} parent=27 // pred_fallthru
                _
              // Predicated region
              $region51: #{if_nodes_run.1} parent=27 // pred_check
                _
              $region52: #{if_nodes_run.1} parent=27 // pred_check_branch
                %253 = sbr.rel target = $region54
              $region53: #{if_nodes_run.1} parent=27 // pred_region
                _
              $region54: #{if_nodes_run.1} parent=27 // pred_fallthru
                _
            $region28: #{if_nodes_run.1} parent=23 // pred_fallthru
              _
            // Predicated region
            $region29: #{if_nodes_run.1} parent=23 // pred_check
              _
            $region30: #{if_nodes_run.1} parent=23 // pred_check_branch
              %167 = sbr.rel target = $region32
            $region31: #{if_nodes_run.1} parent=23 // pred_region
              %s169 = ssub.s32 256, 1
              loop: start=0, step=1, limit=1
              $region33: #{if_nodes_run.1} parent=31 // loop_pre_header
                _
              $region34: #{if_nodes_run.1} parent=31 // loop_header
                %s171 = sphi 0, %s175
                %p172 = scmp.ge.s32.totalorder %s171, 1
                %s176 = sphi %s161, %s161
                %s177 = sphi %s155, %s155
              $region35: #{if_nodes_run.1} parent=31 // loop_header_branch
                %174 = sbr.rel (%p172) target = $region39
              $region36: #{if_nodes_run.1} parent=31 // loop_body
                %v178 = vld [vmem:[%s176] sm:%s169]
                %179 = vst [vmem:[%s177] sm:%s169] %v178
                %v180 = vld [vmem:[%s176 + $0x8] sm:%s169]
                %181 = vst [vmem:[%s177 + $0x8] sm:%s169] %v180
                %v182 = vld [vmem:[%s176 + $0x10] sm:%s169]
                %183 = vst [vmem:[%s177 + $0x10] sm:%s169] %v182
                %v184 = vld [vmem:[%s176 + $0x18] sm:%s169]
                %185 = vst [vmem:[%s177 + $0x18] sm:%s169] %v184
                %v186 = vld [vmem:[%s176 + $0x40] sm:%s169]
                %187 = vst [vmem:[%s177 + $0x20] sm:%s169] %v186
                %v188 = vld [vmem:[%s176 + $0x48] sm:%s169]
                %189 = vst [vmem:[%s177 + $0x28] sm:%s169] %v188
                %v190 = vld [vmem:[%s176 + $0x50] sm:%s169]
                %191 = vst [vmem:[%s177 + $0x30] sm:%s169] %v190
                %v192 = vld [vmem:[%s176 + $0x58] sm:%s169]
                %193 = vst [vmem:[%s177 + $0x38] sm:%s169] %v192
                %v194 = vld [vmem:[%s176 + $0x80] sm:%s169]
                %195 = vst [vmem:[%s177 + $0x40] sm:%s169] %v194
                %v196 = vld [vmem:[%s176 + $0x88] sm:%s169]
                %197 = vst [vmem:[%s177 + $0x48] sm:%s169] %v196
                %v198 = vld [vmem:[%s176 + $0x90] sm:%s169]
                %199 = vst [vmem:[%s177 + $0x50] sm:%s169] %v198
                %v200 = vld [vmem:[%s176 + $0x98] sm:%s169]
                %201 = vst [vmem:[%s177 + $0x58] sm:%s169] %v200
                %v202 = vld [vmem:[%s176 + $0xc0] sm:%s169]
                %203 = vst [vmem:[%s177 + $0x60] sm:%s169] %v202
                %v204 = vld [vmem:[%s176 + $0xc8] sm:%s169]
                %205 = vst [vmem:[%s177 + $0x68] sm:%s169] %v204
                %v206 = vld [vmem:[%s176 + $0xd0] sm:%s169]
                %207 = vst [vmem:[%s177 + $0x70] sm:%s169] %v206
                %v208 = vld [vmem:[%s176 + $0xd8] sm:%s169]
                %209 = vst [vmem:[%s177 + $0x78] sm:%s169] %v208
              $region37: #{if_nodes_run.1} parent=31 // loop_footer
                %s175 = sadd.s32 1, %s171
              $region38: #{if_nodes_run.1} parent=31 // loop_footer_branch
                %170 = sbr.rel target = $region34
              $region39: #{if_nodes_run.1} parent=31 // loop_exit
                _
            $region32: #{if_nodes_run.1} parent=23 // pred_fallthru
              _
          $region24: #{if_nodes_run.1} parent=19 // pred_fallthru
            _
          %254 = vnop
        $region20: #{if_nodes_run.1} parent=15 // pred_fallthru
          _
        // Predicated region
        $region55: #{if_nodes_run.1} parent=15 // pred_check
          %p255 = pneg %p70
        $region56: #{if_nodes_run.1} parent=15 // pred_check_branch
          %257 = sbr.rel (%p255) target = $region58
        $region57: #{if_nodes_run.1} parent=15 // pred_region
          %s258 = sand.u32 %s60, 1
          %s259 = sand.u32 %s60, 1
          %s260 = smul.addr %s259, 128
          %s261 = scalar_lea.vmem [#allocation3], %s260
          %s262 = smul.u32 4, %s17
          %s263 = smul.addr %s262, 8
          %s264 = scalar_lea.vmem %s1, %s263
          // Predicated region
          $region59: #{if_nodes_run.1} parent=57 // pred_check
            _
          $region60: #{if_nodes_run.1} parent=57 // pred_check_branch
            %266 = sbr.rel (0) target = $region62
          $region61: #{if_nodes_run.1} parent=57 // pred_region
            // Predicated region
            $region63: #{if_nodes_run.1} parent=61 // pred_check
              _
            $region64: #{if_nodes_run.1} parent=61 // pred_check_branch
              %268 = sbr.rel (0) target = $region66
            $region65: #{if_nodes_run.1} parent=61 // pred_region
              // Predicated region
              $region78: #{if_nodes_run.1} parent=65 // pred_check
                _
              $region79: #{if_nodes_run.1} parent=65 // pred_check_branch
                %314 = sbr.rel (0) target = $region81
              $region80: #{if_nodes_run.1} parent=65 // pred_region
                loop: start=0, step=1, limit=1
                $region82: #{if_nodes_run.1} parent=80 // loop_pre_header
                  _
                $region83: #{if_nodes_run.1} parent=80 // loop_header
                  %s316 = sphi 0, %s320
                  %p317 = scmp.ge.s32.totalorder %s316, 1
                  %s321 = sphi %s264, %s264
                  %s322 = sphi %s261, %s261
                $region84: #{if_nodes_run.1} parent=80 // loop_header_branch
                  %319 = sbr.rel (%p317) target = $region88
                $region85: #{if_nodes_run.1} parent=80 // loop_body
                  %v323 = vld [vmem:[%s321] sm:$0xff]
                  %324 = vst [vmem:[%s322] sm:$0xff] %v323
                  %v325 = vld [vmem:[%s321 + $0x8] sm:$0xff]
                  %326 = vst [vmem:[%s322 + $0x8] sm:$0xff] %v325
                  %v327 = vld [vmem:[%s321 + $0x10] sm:$0xff]
                  %328 = vst [vmem:[%s322 + $0x10] sm:$0xff] %v327
                  %v329 = vld [vmem:[%s321 + $0x18] sm:$0xff]
                  %330 = vst [vmem:[%s322 + $0x18] sm:$0xff] %v329
                  %v331 = vld [vmem:[%s321 + $0x40] sm:$0xff]
                  %332 = vst [vmem:[%s322 + $0x20] sm:$0xff] %v331
                  %v333 = vld [vmem:[%s321 + $0x48] sm:$0xff]
                  %334 = vst [vmem:[%s322 + $0x28] sm:$0xff] %v333
                  %v335 = vld [vmem:[%s321 + $0x50] sm:$0xff]
                  %336 = vst [vmem:[%s322 + $0x30] sm:$0xff] %v335
                  %v337 = vld [vmem:[%s321 + $0x58] sm:$0xff]
                  %338 = vst [vmem:[%s322 + $0x38] sm:$0xff] %v337
                  %v339 = vld [vmem:[%s321 + $0x80] sm:$0xff]
                  %340 = vst [vmem:[%s322 + $0x40] sm:$0xff] %v339
                  %v341 = vld [vmem:[%s321 + $0x88] sm:$0xff]
                  %342 = vst [vmem:[%s322 + $0x48] sm:$0xff] %v341
                  %v343 = vld [vmem:[%s321 + $0x90] sm:$0xff]
                  %344 = vst [vmem:[%s322 + $0x50] sm:$0xff] %v343
                  %v345 = vld [vmem:[%s321 + $0x98] sm:$0xff]
                  %346 = vst [vmem:[%s322 + $0x58] sm:$0xff] %v345
                  %v347 = vld [vmem:[%s321 + $0xc0] sm:$0xff]
                  %348 = vst [vmem:[%s322 + $0x60] sm:$0xff] %v347
                  %v349 = vld [vmem:[%s321 + $0xc8] sm:$0xff]
                  %350 = vst [vmem:[%s322 + $0x68] sm:$0xff] %v349
                  %v351 = vld [vmem:[%s321 + $0xd0] sm:$0xff]
                  %352 = vst [vmem:[%s322 + $0x70] sm:$0xff] %v351
                  %v353 = vld [vmem:[%s321 + $0xd8] sm:$0xff]
                  %354 = vst [vmem:[%s322 + $0x78] sm:$0xff] %v353
                $region86: #{if_nodes_run.1} parent=80 // loop_footer
                  %s320 = sadd.s32 1, %s316
                $region87: #{if_nodes_run.1} parent=80 // loop_footer_branch
                  %315 = sbr.rel target = $region83
                $region88: #{if_nodes_run.1} parent=80 // loop_exit
                  _
              $region81: #{if_nodes_run.1} parent=65 // pred_fallthru
                _
              // Predicated region
              $region89: #{if_nodes_run.1} parent=65 // pred_check
                _
              $region90: #{if_nodes_run.1} parent=65 // pred_check_branch
                %356 = sbr.rel target = $region92
              $region91: #{if_nodes_run.1} parent=65 // pred_region
                _
              $region92: #{if_nodes_run.1} parent=65 // pred_fallthru
                _
            $region66: #{if_nodes_run.1} parent=61 // pred_fallthru
              _
            // Predicated region
            $region67: #{if_nodes_run.1} parent=61 // pred_check
              _
            $region68: #{if_nodes_run.1} parent=61 // pred_check_branch
              %270 = sbr.rel target = $region70
            $region69: #{if_nodes_run.1} parent=61 // pred_region
              %s272 = ssub.s32 256, 1
              loop: start=0, step=1, limit=1
              $region71: #{if_nodes_run.1} parent=69 // loop_pre_header
                _
              $region72: #{if_nodes_run.1} parent=69 // loop_header
                %s274 = sphi 0, %s278
                %p275 = scmp.ge.s32.totalorder %s274, 1
                %s279 = sphi %s264, %s264
                %s280 = sphi %s261, %s261
              $region73: #{if_nodes_run.1} parent=69 // loop_header_branch
                %277 = sbr.rel (%p275) target = $region77
              $region74: #{if_nodes_run.1} parent=69 // loop_body
                %v281 = vld [vmem:[%s279] sm:%s272]
                %282 = vst [vmem:[%s280] sm:%s272] %v281
                %v283 = vld [vmem:[%s279 + $0x8] sm:%s272]
                %284 = vst [vmem:[%s280 + $0x8] sm:%s272] %v283
                %v285 = vld [vmem:[%s279 + $0x10] sm:%s272]
                %286 = vst [vmem:[%s280 + $0x10] sm:%s272] %v285
                %v287 = vld [vmem:[%s279 + $0x18] sm:%s272]
                %288 = vst [vmem:[%s280 + $0x18] sm:%s272] %v287
                %v289 = vld [vmem:[%s279 + $0x40] sm:%s272]
                %290 = vst [vmem:[%s280 + $0x20] sm:%s272] %v289
                %v291 = vld [vmem:[%s279 + $0x48] sm:%s272]
                %292 = vst [vmem:[%s280 + $0x28] sm:%s272] %v291
                %v293 = vld [vmem:[%s279 + $0x50] sm:%s272]
                %294 = vst [vmem:[%s280 + $0x30] sm:%s272] %v293
                %v295 = vld [vmem:[%s279 + $0x58] sm:%s272]
                %296 = vst [vmem:[%s280 + $0x38] sm:%s272] %v295
                %v297 = vld [vmem:[%s279 + $0x80] sm:%s272]
                %298 = vst [vmem:[%s280 + $0x40] sm:%s272] %v297
                %v299 = vld [vmem:[%s279 + $0x88] sm:%s272]
                %300 = vst [vmem:[%s280 + $0x48] sm:%s272] %v299
                %v301 = vld [vmem:[%s279 + $0x90] sm:%s272]
                %302 = vst [vmem:[%s280 + $0x50] sm:%s272] %v301
                %v303 = vld [vmem:[%s279 + $0x98] sm:%s272]
                %304 = vst [vmem:[%s280 + $0x58] sm:%s272] %v303
                %v305 = vld [vmem:[%s279 + $0xc0] sm:%s272]
                %306 = vst [vmem:[%s280 + $0x60] sm:%s272] %v305
                %v307 = vld [vmem:[%s279 + $0xc8] sm:%s272]
                %308 = vst [vmem:[%s280 + $0x68] sm:%s272] %v307
                %v309 = vld [vmem:[%s279 + $0xd0] sm:%s272]
                %310 = vst [vmem:[%s280 + $0x70] sm:%s272] %v309
                %v311 = vld [vmem:[%s279 + $0xd8] sm:%s272]
                %312 = vst [vmem:[%s280 + $0x78] sm:%s272] %v311
              $region75: #{if_nodes_run.1} parent=69 // loop_footer
                %s278 = sadd.s32 1, %s274
              $region76: #{if_nodes_run.1} parent=69 // loop_footer_branch
                %273 = sbr.rel target = $region72
              $region77: #{if_nodes_run.1} parent=69 // loop_exit
                _
            $region70: #{if_nodes_run.1} parent=61 // pred_fallthru
              _
          $region62: #{if_nodes_run.1} parent=57 // pred_fallthru
            _
          %357 = vnop
        $region58: #{if_nodes_run.1} parent=15 // pred_fallthru
          _
      $region16: #{if_nodes_run.1} parent=5 // pred_fallthru
        _
      %p358 = scmp.le.s32.totalorder 1, %s10
      %p359 = scmp.lt.s32.totalorder %s10, 5
      %p360 = pnand %p358, %p359
      %p361 = pneg %p360
      // Predicated region
      $region93: #{if_nodes_run.1} parent=5 // pred_check
        _
      $region94: #{if_nodes_run.1} parent=5 // pred_check_branch
        %363 = sbr.rel (%p360) target = $region96
      $region95: #{if_nodes_run.1} parent=5 // pred_region
        %s364 = ssub.s32 %s10, 1
        %s365 = sand.u32 %s37, 1
        %s366 = sand.u32 %s37, 1
        %s367 = smul.addr %s366, 128
        %s368 = scalar_lea.vmem [#allocation2], %s367
        // Predicated region
        $region97: #{if_nodes_run.1} parent=95 // pred_check
          %p369 = pneg %p50
        $region98: #{if_nodes_run.1} parent=95 // pred_check_branch
          %371 = sbr.rel (%p369) target = $region100
        $region99: #{if_nodes_run.1} parent=95 // pred_region
          _
        $region100: #{if_nodes_run.1} parent=95 // pred_fallthru
          _
        %s372 = sand.u32 %s63, 1
        %s373 = sand.u32 %s63, 1
        %s374 = smul.addr %s373, 128
        %s375 = scalar_lea.vmem [#allocation3], %s374
        // Predicated region
        $region101: #{if_nodes_run.1} parent=95 // pred_check
          %p376 = pneg %p76
        $region102: #{if_nodes_run.1} parent=95 // pred_check_branch
          %378 = sbr.rel (%p376) target = $region104
        $region103: #{if_nodes_run.1} parent=95 // pred_region
          _
        $region104: #{if_nodes_run.1} parent=95 // pred_fallthru
          _
        %s379 = sand.u32 %s37, 1
        %s380 = sand.u32 %s37, 1
        %s381 = smul.addr %s380, 128
        %s382 = scalar_lea.vmem [#allocation2], %s381
        %p383 = pneg %p50
        %p384 = pneg %p47
        %s385 = sand.u32 %s63, 1
        %s386 = sand.u32 %s63, 1
        %s387 = smul.addr %s386, 128
        %s388 = scalar_lea.vmem [#allocation3], %s387
        %p389 = pneg %p76
        %p390 = pneg %p73
        %p391 = pneg %p104
        %p392 = pneg %p101
        %s393 = sand.u32 %s91, 1
        %s394 = sand.u32 %s91, 1
        %s395 = smul.addr %s394, 32
        %s396 = scalar_lea.vmem [#allocation4], %s395
        %p397 = pneg %p130
        %p398 = pneg %p127
        %s399 = sand.u32 %s117, 1
        %s400 = sand.u32 %s117, 1
        %s401 = smul.addr %s400, 128
        %s402 = scalar_lea.vmem [#allocation5], %s401
        %s403 = smul.u32 4, %s20
        %s404 = smul.u32 4, %s19
        %s405 = smul.u32 4, %s19
        %s406 = smul.u32 4, %s20
        %s407 = smul.u32 4, %s19
        %s408 = smul.u32 4, %s19
        %p411 = scmp.eq.s32.totalorder %s20, 0
        // Predicated region
        $region105: #{if_nodes_run.1} parent=95 // pred_check
          %p412 = pneg %p411
        $region106: #{if_nodes_run.1} parent=95 // pred_check_branch
          %414 = sbr.rel (%p412) target = $region108
        $region107: #{if_nodes_run.1} parent=95 // pred_region
          %v415 = vld [vmem:[%s375] sm:$0xff]
          %v416 = vld [vmem:[%s375 + $0x8] sm:$0xff]
          %v417 = vld [vmem:[%s375 + $0x10] sm:$0xff]
          %v418 = vld [vmem:[%s375 + $0x18] sm:$0xff]
          %v419 = vld [vmem:[%s375 + $0x20] sm:$0xff]
          %v420 = vld [vmem:[%s375 + $0x28] sm:$0xff]
          %v421 = vld [vmem:[%s375 + $0x30] sm:$0xff]
          %v422 = vld [vmem:[%s375 + $0x38] sm:$0xff]
          %v423 = vld [vmem:[%s375 + $0x40] sm:$0xff]
          %v424 = vld [vmem:[%s375 + $0x48] sm:$0xff]
          %v425 = vld [vmem:[%s375 + $0x50] sm:$0xff]
          %v426 = vld [vmem:[%s375 + $0x58] sm:$0xff]
          %v427 = vld [vmem:[%s375 + $0x60] sm:$0xff]
          %v428 = vld [vmem:[%s375 + $0x68] sm:$0xff]
          %v429 = vld [vmem:[%s375 + $0x70] sm:$0xff]
          %v430 = vld [vmem:[%s375 + $0x78] sm:$0xff]
          %431 = vst [vmem:[%s402] sm:$0xff] %v415
          %432 = vst [vmem:[%s402 + $0x8] sm:$0xff] %v416
          %433 = vst [vmem:[%s402 + $0x10] sm:$0xff] %v417
          %434 = vst [vmem:[%s402 + $0x18] sm:$0xff] %v418
          %435 = vst [vmem:[%s402 + $0x20] sm:$0xff] %v419
          %436 = vst [vmem:[%s402 + $0x28] sm:$0xff] %v420
          %437 = vst [vmem:[%s402 + $0x30] sm:$0xff] %v421
          %438 = vst [vmem:[%s402 + $0x38] sm:$0xff] %v422
          %439 = vst [vmem:[%s402 + $0x40] sm:$0xff] %v423
          %440 = vst [vmem:[%s402 + $0x48] sm:$0xff] %v424
          %441 = vst [vmem:[%s402 + $0x50] sm:$0xff] %v425
          %442 = vst [vmem:[%s402 + $0x58] sm:$0xff] %v426
          %443 = vst [vmem:[%s402 + $0x60] sm:$0xff] %v427
          %444 = vst [vmem:[%s402 + $0x68] sm:$0xff] %v428
          %445 = vst [vmem:[%s402 + $0x70] sm:$0xff] %v429
          %446 = vst [vmem:[%s402 + $0x78] sm:$0xff] %v430
        $region108: #{if_nodes_run.1} parent=95 // pred_fallthru
          _
        %v447 = vld [vmem:[%s368] sm:$0xff]
        %v448 = vld [vmem:[%s368 + $0x8] sm:$0xff]
        %v449 = vld [vmem:[%s368 + $0x10] sm:$0xff]
        %v450 = vld [vmem:[%s368 + $0x18] sm:$0xff]
        %v451 = vld [vmem:[%s402] sm:$0xff]
        %v452 = vld [vmem:[%s402 + $0x8] sm:$0xff]
        %v453 = vld [vmem:[%s402 + $0x10] sm:$0xff]
        %v454 = vld [vmem:[%s402 + $0x18] sm:$0xff]
        %s455 = scalar_lea.vmem %s402, 32 [#allocation5]
        %v456 = vld [vmem:[%s455] sm:$0xff]
        %v457 = vld [vmem:[%s455 + $0x8] sm:$0xff]
        %v458 = vld [vmem:[%s455 + $0x10] sm:$0xff]
        %v459 = vld [vmem:[%s455 + $0x18] sm:$0xff]
        %s460 = scalar_lea.vmem %s402, 64 [#allocation5]
        %v461 = vld [vmem:[%s460] sm:$0xff]
        %v462 = vld [vmem:[%s460 + $0x8] sm:$0xff]
        %v463 = vld [vmem:[%s460 + $0x10] sm:$0xff]
        %v464 = vld [vmem:[%s460 + $0x18] sm:$0xff]
        %vm465 = vcmp.le.f32.partialorder %v456, 0.0
        %vm466 = vcmp.le.f32.partialorder %v457, 0.0
        %vm467 = vcmp.le.f32.partialorder %v458, 0.0
        %vm468 = vcmp.le.f32.partialorder %v459, 0.0
        %v469 = vsel %vm465, %v447, 0.0
        %v470 = vsel %vm466, %v448, 0.0
        %v471 = vsel %vm467, %v449, 0.0
        %v472 = vsel %vm468, %v450, 0.0
        %v473 = vadd.f32 %v451, %v469
        %v474 = vadd.f32 %v452, %v470
        %v475 = vadd.f32 %v453, %v471
        %v476 = vadd.f32 %v454, %v472
        %v477 = vsub.f32 %v456, 1.0
        %v478 = vsub.f32 %v457, 1.0
        %v479 = vsub.f32 %v458, 1.0
        %v480 = vsub.f32 %v459, 1.0
        %vm481 = vcmp.ge.f32.partialorder %v473, -52.0
        %vm482 = vcmp.ge.f32.partialorder %v474, -52.0
        %vm483 = vcmp.ge.f32.partialorder %v475, -52.0
        %vm484 = vcmp.ge.f32.partialorder %v476, -52.0
        %v485 = vsel %vm481, 5.0, %v477
        %v486 = vsel %vm482, 5.0, %v478
        %v487 = vsel %vm483, 5.0, %v479
        %v488 = vsel %vm484, 5.0, %v480
        %v489 = vsel %vm481, -65.0, %v473
        %v490 = vsel %vm482, -65.0, %v474
        %v491 = vsel %vm483, -65.0, %v475
        %v492 = vsel %vm484, -65.0, %v476
        %v493 = vmax.f32 %v489, -70.0
        %v494 = vmax.f32 %v490, -70.0
        %v495 = vmax.f32 %v491, -70.0
        %v496 = vmax.f32 %v492, -70.0
        %v497 = vmul.f32 %v461, 0.95122945
        %v498 = vmul.f32 %v462, 0.95122945
        %v499 = vmul.f32 %v463, 0.95122945
        %v500 = vmul.f32 %v464, 0.95122945
        %v501 = vsel %vm481, 1.0, %v497
        %v502 = vsel %vm482, 1.0, %v498
        %v503 = vsel %vm483, 1.0, %v499
        %v504 = vsel %vm484, 1.0, %v500
        %505 = vst [vmem:[%s402] sm:$0xff] %v493
        %506 = vst [vmem:[%s402 + $0x8] sm:$0xff] %v494
        %507 = vst [vmem:[%s402 + $0x10] sm:$0xff] %v495
        %508 = vst [vmem:[%s402 + $0x18] sm:$0xff] %v496
        %509 = vst [vmem:[%s455] sm:$0xff] %v485
        %510 = vst [vmem:[%s455 + $0x8] sm:$0xff] %v486
        %511 = vst [vmem:[%s455 + $0x10] sm:$0xff] %v487
        %512 = vst [vmem:[%s455 + $0x18] sm:$0xff] %v488
        %513 = vst [vmem:[%s460] sm:$0xff] %v501
        %514 = vst [vmem:[%s460 + $0x8] sm:$0xff] %v502
        %515 = vst [vmem:[%s460 + $0x10] sm:$0xff] %v503
        %516 = vst [vmem:[%s460 + $0x18] sm:$0xff] %v504
        %s517 = scalar_lea.vmem %s402, 96 [#allocation5]
        %v518 = vld [vmem:[%s517] sm:$0xff]
        %v519 = vld [vmem:[%s517 + $0x8] sm:$0xff]
        %v520 = vld [vmem:[%s517 + $0x10] sm:$0xff]
        %v521 = vld [vmem:[%s517 + $0x18] sm:$0xff]
        %v522 = vadd.f32 %v518, %v447
        %v523 = vadd.f32 %v519, %v448
        %v524 = vadd.f32 %v520, %v449
        %v525 = vadd.f32 %v521, %v450
        %526 = vst [vmem:[%s517] sm:$0xff] %v522
        %527 = vst [vmem:[%s517 + $0x8] sm:$0xff] %v523
        %528 = vst [vmem:[%s517 + $0x10] sm:$0xff] %v524
        %529 = vst [vmem:[%s517 + $0x18] sm:$0xff] %v525
        %vm530 = vmpackc.low %vm482, %vm481
        %vm531 = vmpackc.low %vm484, %vm483
        %v532 = vsel %vm530, 16711935, 0
        %v533 = vsel %vm531, 16711935, 0
        %v534 = vpack.c.b8 %v533, %v532
        %vm535 = vnez %v534
        %v536 = vsel %vm535, 16843009, 0
        %v537 = vunpack.c.0.s8 %v536
        %v538 = vunpack.c.1.s8 %v536
        %v539 = vunpack.c.2.s8 %v536
        %v540 = vunpack.c.3.s8 %v536
        %v541 = vpack.c.b16 %v537, %v537
        %v542 = vpack.c.b8 %v541, %v541
        %v543 = vpack.c.b16 %v538, %v538
        %v544 = vpack.c.b8 %v543, %v543
        %v545 = vpack.c.b16 %v539, %v539
        %v546 = vpack.c.b8 %v545, %v545
        %v547 = vpack.c.b16 %v540, %v540
        %v548 = vpack.c.b8 %v547, %v547
        %549 = vst [vmem:[%s396] sm:$0x3] %v542
        %550 = vst [vmem:[%s396 + $0x2] sm:$0x3] %v544
        %551 = vst [vmem:[%s396 + $0x4] sm:$0x3] %v546
        %552 = vst [vmem:[%s396 + $0x6] sm:$0x3] %v548
        %s553 = scalar_lea.vmem %s368, 32 [#allocation2]
        %v554 = vld [vmem:[%s553] sm:$0xff]
        %v555 = vld [vmem:[%s553 + $0x8] sm:$0xff]
        %v556 = vld [vmem:[%s553 + $0x10] sm:$0xff]
        %v557 = vld [vmem:[%s553 + $0x18] sm:$0xff]
        %v558 = vld [vmem:[%s402] sm:$0xff]
        %v559 = vld [vmem:[%s402 + $0x8] sm:$0xff]
        %v560 = vld [vmem:[%s402 + $0x10] sm:$0xff]
        %v561 = vld [vmem:[%s402 + $0x18] sm:$0xff]
        %v562 = vld [vmem:[%s455] sm:$0xff]
        %v563 = vld [vmem:[%s455 + $0x8] sm:$0xff]
        %v564 = vld [vmem:[%s455 + $0x10] sm:$0xff]
        %v565 = vld [vmem:[%s455 + $0x18] sm:$0xff]
        %v566 = vld [vmem:[%s460] sm:$0xff]
        %v567 = vld [vmem:[%s460 + $0x8] sm:$0xff]
        %v568 = vld [vmem:[%s460 + $0x10] sm:$0xff]
        %v569 = vld [vmem:[%s460 + $0x18] sm:$0xff]
        %vm570 = vcmp.le.f32.partialorder %v562, 0.0
        %vm571 = vcmp.le.f32.partialorder %v563, 0.0
        %vm572 = vcmp.le.f32.partialorder %v564, 0.0
        %vm573 = vcmp.le.f32.partialorder %v565, 0.0
        %v574 = vsel %vm570, %v554, 0.0
        %v575 = vsel %vm571, %v555, 0.0
        %v576 = vsel %vm572, %v556, 0.0
        %v577 = vsel %vm573, %v557, 0.0
        %v578 = vadd.f32 %v558, %v574
        %v579 = vadd.f32 %v559, %v575
        %v580 = vadd.f32 %v560, %v576
        %v581 = vadd.f32 %v561, %v577
        %v582 = vsub.f32 %v562, 1.0
        %v583 = vsub.f32 %v563, 1.0
        %v584 = vsub.f32 %v564, 1.0
        %v585 = vsub.f32 %v565, 1.0
        %vm586 = vcmp.ge.f32.partialorder %v578, -52.0
        %vm587 = vcmp.ge.f32.partialorder %v579, -52.0
        %vm588 = vcmp.ge.f32.partialorder %v580, -52.0
        %vm589 = vcmp.ge.f32.partialorder %v581, -52.0
        %v590 = vsel %vm586, 5.0, %v582
        %v591 = vsel %vm587, 5.0, %v583
        %v592 = vsel %vm588, 5.0, %v584
        %v593 = vsel %vm589, 5.0, %v585
        %v594 = vsel %vm586, -65.0, %v578
        %v595 = vsel %vm587, -65.0, %v579
        %v596 = vsel %vm588, -65.0, %v580
        %v597 = vsel %vm589, -65.0, %v581
        %v598 = vmax.f32 %v594, -70.0
        %v599 = vmax.f32 %v595, -70.0
        %v600 = vmax.f32 %v596, -70.0
        %v601 = vmax.f32 %v597, -70.0
        %v602 = vmul.f32 %v566, 0.95122945
        %v603 = vmul.f32 %v567, 0.95122945
        %v604 = vmul.f32 %v568, 0.95122945
        %v605 = vmul.f32 %v569, 0.95122945
        %v606 = vsel %vm586, 1.0, %v602
        %v607 = vsel %vm587, 1.0, %v603
        %v608 = vsel %vm588, 1.0, %v604
        %v609 = vsel %vm589, 1.0, %v605
        %610 = vst [vmem:[%s402] sm:$0xff] %v598
        %611 = vst [vmem:[%s402 + $0x8] sm:$0xff] %v599
        %612 = vst [vmem:[%s402 + $0x10] sm:$0xff] %v600
        %613 = vst [vmem:[%s402 + $0x18] sm:$0xff] %v601
        %614 = vst [vmem:[%s455] sm:$0xff] %v590
        %615 = vst [vmem:[%s455 + $0x8] sm:$0xff] %v591
        %616 = vst [vmem:[%s455 + $0x10] sm:$0xff] %v592
        %617 = vst [vmem:[%s455 + $0x18] sm:$0xff] %v593
        %618 = vst [vmem:[%s460] sm:$0xff] %v606
        %619 = vst [vmem:[%s460 + $0x8] sm:$0xff] %v607
        %620 = vst [vmem:[%s460 + $0x10] sm:$0xff] %v608
        %621 = vst [vmem:[%s460 + $0x18] sm:$0xff] %v609
        %v622 = vld [vmem:[%s517] sm:$0xff]
        %v623 = vld [vmem:[%s517 + $0x8] sm:$0xff]
        %v624 = vld [vmem:[%s517 + $0x10] sm:$0xff]
        %v625 = vld [vmem:[%s517 + $0x18] sm:$0xff]
        %v626 = vadd.f32 %v622, %v554
        %v627 = vadd.f32 %v623, %v555
        %v628 = vadd.f32 %v624, %v556
        %v629 = vadd.f32 %v625, %v557
        %630 = vst [vmem:[%s517] sm:$0xff] %v626
        %631 = vst [vmem:[%s517 + $0x8] sm:$0xff] %v627
        %632 = vst [vmem:[%s517 + $0x10] sm:$0xff] %v628
        %633 = vst [vmem:[%s517 + $0x18] sm:$0xff] %v629
        %vm634 = vmpackc.low %vm587, %vm586
        %vm635 = vmpackc.low %vm589, %vm588
        %v636 = vsel %vm634, 16711935, 0
        %v637 = vsel %vm635, 16711935, 0
        %v638 = vpack.c.b8 %v637, %v636
        %vm639 = vnez %v638
        %v640 = vsel %vm639, 16843009, 0
        %v641 = vunpack.c.0.s8 %v640
        %v642 = vunpack.c.1.s8 %v640
        %v643 = vunpack.c.2.s8 %v640
        %v644 = vunpack.c.3.s8 %v640
        %v645 = vpack.c.b16 %v641, %v641
        %v646 = vpack.c.b8 %v645, %v645
        %v647 = vpack.c.b16 %v642, %v642
        %v648 = vpack.c.b8 %v647, %v647
        %v649 = vpack.c.b16 %v643, %v643
        %v650 = vpack.c.b8 %v649, %v649
        %v651 = vpack.c.b16 %v644, %v644
        %v652 = vpack.c.b8 %v651, %v651
        %s653 = scalar_lea.vmem %s396, 8 [#allocation4]
        %654 = vst [vmem:[%s653] sm:$0x3] %v646
        %655 = vst [vmem:[%s653 + $0x2] sm:$0x3] %v648
        %656 = vst [vmem:[%s653 + $0x4] sm:$0x3] %v650
        %657 = vst [vmem:[%s653 + $0x6] sm:$0x3] %v652
        %s658 = scalar_lea.vmem %s368, 64 [#allocation2]
        %v659 = vld [vmem:[%s658] sm:$0xff]
        %v660 = vld [vmem:[%s658 + $0x8] sm:$0xff]
        %v661 = vld [vmem:[%s658 + $0x10] sm:$0xff]
        %v662 = vld [vmem:[%s658 + $0x18] sm:$0xff]
        %v663 = vld [vmem:[%s402] sm:$0xff]
        %v664 = vld [vmem:[%s402 + $0x8] sm:$0xff]
        %v665 = vld [vmem:[%s402 + $0x10] sm:$0xff]
        %v666 = vld [vmem:[%s402 + $0x18] sm:$0xff]
        %v667 = vld [vmem:[%s455] sm:$0xff]
        %v668 = vld [vmem:[%s455 + $0x8] sm:$0xff]
        %v669 = vld [vmem:[%s455 + $0x10] sm:$0xff]
        %v670 = vld [vmem:[%s455 + $0x18] sm:$0xff]
        %v671 = vld [vmem:[%s460] sm:$0xff]
        %v672 = vld [vmem:[%s460 + $0x8] sm:$0xff]
        %v673 = vld [vmem:[%s460 + $0x10] sm:$0xff]
        %v674 = vld [vmem:[%s460 + $0x18] sm:$0xff]
        %vm675 = vcmp.le.f32.partialorder %v667, 0.0
        %vm676 = vcmp.le.f32.partialorder %v668, 0.0
        %vm677 = vcmp.le.f32.partialorder %v669, 0.0
        %vm678 = vcmp.le.f32.partialorder %v670, 0.0
        %v679 = vsel %vm675, %v659, 0.0
        %v680 = vsel %vm676, %v660, 0.0
        %v681 = vsel %vm677, %v661, 0.0
        %v682 = vsel %vm678, %v662, 0.0
        %v683 = vadd.f32 %v663, %v679
        %v684 = vadd.f32 %v664, %v680
        %v685 = vadd.f32 %v665, %v681
        %v686 = vadd.f32 %v666, %v682
        %v687 = vsub.f32 %v667, 1.0
        %v688 = vsub.f32 %v668, 1.0
        %v689 = vsub.f32 %v669, 1.0
        %v690 = vsub.f32 %v670, 1.0
        %vm691 = vcmp.ge.f32.partialorder %v683, -52.0
        %vm692 = vcmp.ge.f32.partialorder %v684, -52.0
        %vm693 = vcmp.ge.f32.partialorder %v685, -52.0
        %vm694 = vcmp.ge.f32.partialorder %v686, -52.0
        %v695 = vsel %vm691, 5.0, %v687
        %v696 = vsel %vm692, 5.0, %v688
        %v697 = vsel %vm693, 5.0, %v689
        %v698 = vsel %vm694, 5.0, %v690
        %v699 = vsel %vm691, -65.0, %v683
        %v700 = vsel %vm692, -65.0, %v684
        %v701 = vsel %vm693, -65.0, %v685
        %v702 = vsel %vm694, -65.0, %v686
        %v703 = vmax.f32 %v699, -70.0
        %v704 = vmax.f32 %v700, -70.0
        %v705 = vmax.f32 %v701, -70.0
        %v706 = vmax.f32 %v702, -70.0
        %v707 = vmul.f32 %v671, 0.95122945
        %v708 = vmul.f32 %v672, 0.95122945
        %v709 = vmul.f32 %v673, 0.95122945
        %v710 = vmul.f32 %v674, 0.95122945
        %v711 = vsel %vm691, 1.0, %v707
        %v712 = vsel %vm692, 1.0, %v708
        %v713 = vsel %vm693, 1.0, %v709
        %v714 = vsel %vm694, 1.0, %v710
        %715 = vst [vmem:[%s402] sm:$0xff] %v703
        %716 = vst [vmem:[%s402 + $0x8] sm:$0xff] %v704
        %717 = vst [vmem:[%s402 + $0x10] sm:$0xff] %v705
        %718 = vst [vmem:[%s402 + $0x18] sm:$0xff] %v706
        %719 = vst [vmem:[%s455] sm:$0xff] %v695
        %720 = vst [vmem:[%s455 + $0x8] sm:$0xff] %v696
        %721 = vst [vmem:[%s455 + $0x10] sm:$0xff] %v697
        %722 = vst [vmem:[%s455 + $0x18] sm:$0xff] %v698
        %723 = vst [vmem:[%s460] sm:$0xff] %v711
        %724 = vst [vmem:[%s460 + $0x8] sm:$0xff] %v712
        %725 = vst [vmem:[%s460 + $0x10] sm:$0xff] %v713
        %726 = vst [vmem:[%s460 + $0x18] sm:$0xff] %v714
        %v727 = vld [vmem:[%s517] sm:$0xff]
        %v728 = vld [vmem:[%s517 + $0x8] sm:$0xff]
        %v729 = vld [vmem:[%s517 + $0x10] sm:$0xff]
        %v730 = vld [vmem:[%s517 + $0x18] sm:$0xff]
        %v731 = vadd.f32 %v727, %v659
        %v732 = vadd.f32 %v728, %v660
        %v733 = vadd.f32 %v729, %v661
        %v734 = vadd.f32 %v730, %v662
        %735 = vst [vmem:[%s517] sm:$0xff] %v731
        %736 = vst [vmem:[%s517 + $0x8] sm:$0xff] %v732
        %737 = vst [vmem:[%s517 + $0x10] sm:$0xff] %v733
        %738 = vst [vmem:[%s517 + $0x18] sm:$0xff] %v734
        %vm739 = vmpackc.low %vm692, %vm691
        %vm740 = vmpackc.low %vm694, %vm693
        %v741 = vsel %vm739, 16711935, 0
        %v742 = vsel %vm740, 16711935, 0
        %v743 = vpack.c.b8 %v742, %v741
        %vm744 = vnez %v743
        %v745 = vsel %vm744, 16843009, 0
        %v746 = vunpack.c.0.s8 %v745
        %v747 = vunpack.c.1.s8 %v745
        %v748 = vunpack.c.2.s8 %v745
        %v749 = vunpack.c.3.s8 %v745
        %v750 = vpack.c.b16 %v746, %v746
        %v751 = vpack.c.b8 %v750, %v750
        %v752 = vpack.c.b16 %v747, %v747
        %v753 = vpack.c.b8 %v752, %v752
        %v754 = vpack.c.b16 %v748, %v748
        %v755 = vpack.c.b8 %v754, %v754
        %v756 = vpack.c.b16 %v749, %v749
        %v757 = vpack.c.b8 %v756, %v756
        %s758 = scalar_lea.vmem %s396, 16 [#allocation4]
        %759 = vst [vmem:[%s758] sm:$0x3] %v751
        %760 = vst [vmem:[%s758 + $0x2] sm:$0x3] %v753
        %761 = vst [vmem:[%s758 + $0x4] sm:$0x3] %v755
        %762 = vst [vmem:[%s758 + $0x6] sm:$0x3] %v757
        %s763 = scalar_lea.vmem %s368, 96 [#allocation2]
        %v764 = vld [vmem:[%s763] sm:$0xff]
        %v765 = vld [vmem:[%s763 + $0x8] sm:$0xff]
        %v766 = vld [vmem:[%s763 + $0x10] sm:$0xff]
        %v767 = vld [vmem:[%s763 + $0x18] sm:$0xff]
        %v768 = vld [vmem:[%s402] sm:$0xff]
        %v769 = vld [vmem:[%s402 + $0x8] sm:$0xff]
        %v770 = vld [vmem:[%s402 + $0x10] sm:$0xff]
        %v771 = vld [vmem:[%s402 + $0x18] sm:$0xff]
        %v772 = vld [vmem:[%s455] sm:$0xff]
        %v773 = vld [vmem:[%s455 + $0x8] sm:$0xff]
        %v774 = vld [vmem:[%s455 + $0x10] sm:$0xff]
        %v775 = vld [vmem:[%s455 + $0x18] sm:$0xff]
        %v776 = vld [vmem:[%s460] sm:$0xff]
        %v777 = vld [vmem:[%s460 + $0x8] sm:$0xff]
        %v778 = vld [vmem:[%s460 + $0x10] sm:$0xff]
        %v779 = vld [vmem:[%s460 + $0x18] sm:$0xff]
        %vm780 = vcmp.le.f32.partialorder %v772, 0.0
        %vm781 = vcmp.le.f32.partialorder %v773, 0.0
        %vm782 = vcmp.le.f32.partialorder %v774, 0.0
        %vm783 = vcmp.le.f32.partialorder %v775, 0.0
        %v784 = vsel %vm780, %v764, 0.0
        %v785 = vsel %vm781, %v765, 0.0
        %v786 = vsel %vm782, %v766, 0.0
        %v787 = vsel %vm783, %v767, 0.0
        %v788 = vadd.f32 %v768, %v784
        %v789 = vadd.f32 %v769, %v785
        %v790 = vadd.f32 %v770, %v786
        %v791 = vadd.f32 %v771, %v787
        %v792 = vsub.f32 %v772, 1.0
        %v793 = vsub.f32 %v773, 1.0
        %v794 = vsub.f32 %v774, 1.0
        %v795 = vsub.f32 %v775, 1.0
        %vm796 = vcmp.ge.f32.partialorder %v788, -52.0
        %vm797 = vcmp.ge.f32.partialorder %v789, -52.0
        %vm798 = vcmp.ge.f32.partialorder %v790, -52.0
        %vm799 = vcmp.ge.f32.partialorder %v791, -52.0
        %v800 = vsel %vm796, 5.0, %v792
        %v801 = vsel %vm797, 5.0, %v793
        %v802 = vsel %vm798, 5.0, %v794
        %v803 = vsel %vm799, 5.0, %v795
        %v804 = vsel %vm796, -65.0, %v788
        %v805 = vsel %vm797, -65.0, %v789
        %v806 = vsel %vm798, -65.0, %v790
        %v807 = vsel %vm799, -65.0, %v791
        %v808 = vmax.f32 %v804, -70.0
        %v809 = vmax.f32 %v805, -70.0
        %v810 = vmax.f32 %v806, -70.0
        %v811 = vmax.f32 %v807, -70.0
        %v812 = vmul.f32 %v776, 0.95122945
        %v813 = vmul.f32 %v777, 0.95122945
        %v814 = vmul.f32 %v778, 0.95122945
        %v815 = vmul.f32 %v779, 0.95122945
        %v816 = vsel %vm796, 1.0, %v812
        %v817 = vsel %vm797, 1.0, %v813
        %v818 = vsel %vm798, 1.0, %v814
        %v819 = vsel %vm799, 1.0, %v815
        %820 = vst [vmem:[%s402] sm:$0xff] %v808
        %821 = vst [vmem:[%s402 + $0x8] sm:$0xff] %v809
        %822 = vst [vmem:[%s402 + $0x10] sm:$0xff] %v810
        %823 = vst [vmem:[%s402 + $0x18] sm:$0xff] %v811
        %824 = vst [vmem:[%s455] sm:$0xff] %v800
        %825 = vst [vmem:[%s455 + $0x8] sm:$0xff] %v801
        %826 = vst [vmem:[%s455 + $0x10] sm:$0xff] %v802
        %827 = vst [vmem:[%s455 + $0x18] sm:$0xff] %v803
        %828 = vst [vmem:[%s460] sm:$0xff] %v816
        %829 = vst [vmem:[%s460 + $0x8] sm:$0xff] %v817
        %830 = vst [vmem:[%s460 + $0x10] sm:$0xff] %v818
        %831 = vst [vmem:[%s460 + $0x18] sm:$0xff] %v819
        %v832 = vld [vmem:[%s517] sm:$0xff]
        %v833 = vld [vmem:[%s517 + $0x8] sm:$0xff]
        %v834 = vld [vmem:[%s517 + $0x10] sm:$0xff]
        %v835 = vld [vmem:[%s517 + $0x18] sm:$0xff]
        %v836 = vadd.f32 %v832, %v764
        %v837 = vadd.f32 %v833, %v765
        %v838 = vadd.f32 %v834, %v766
        %v839 = vadd.f32 %v835, %v767
        %840 = vst [vmem:[%s517] sm:$0xff] %v836
        %841 = vst [vmem:[%s517 + $0x8] sm:$0xff] %v837
        %842 = vst [vmem:[%s517 + $0x10] sm:$0xff] %v838
        %843 = vst [vmem:[%s517 + $0x18] sm:$0xff] %v839
        %vm844 = vmpackc.low %vm797, %vm796
        %vm845 = vmpackc.low %vm799, %vm798
        %v846 = vsel %vm844, 16711935, 0
        %v847 = vsel %vm845, 16711935, 0
        %v848 = vpack.c.b8 %v847, %v846
        %vm849 = vnez %v848
        %v850 = vsel %vm849, 16843009, 0
        %v851 = vunpack.c.0.s8 %v850
        %v852 = vunpack.c.1.s8 %v850
        %v853 = vunpack.c.2.s8 %v850
        %v854 = vunpack.c.3.s8 %v850
        %v855 = vpack.c.b16 %v851, %v851
        %v856 = vpack.c.b8 %v855, %v855
        %v857 = vpack.c.b16 %v852, %v852
        %v858 = vpack.c.b8 %v857, %v857
        %v859 = vpack.c.b16 %v853, %v853
        %v860 = vpack.c.b8 %v859, %v859
        %v861 = vpack.c.b16 %v854, %v854
        %v862 = vpack.c.b8 %v861, %v861
        %s863 = scalar_lea.vmem %s396, 24 [#allocation4]
        %864 = vst [vmem:[%s863] sm:$0x3] %v856
        %865 = vst [vmem:[%s863 + $0x2] sm:$0x3] %v858
        %866 = vst [vmem:[%s863 + $0x4] sm:$0x3] %v860
        %867 = vst [vmem:[%s863 + $0x6] sm:$0x3] %v862
        %s868 = sand.u32 %s91, 1
        %s869 = sand.u32 %s91, 1
        %s870 = smul.addr %s869, 32
        %s871 = scalar_lea.vmem [#allocation4], %s870
        %s872 = sand.u32 %s117, 1
        %s873 = sand.u32 %s117, 1
        %s874 = smul.addr %s873, 128
        %s875 = scalar_lea.vmem [#allocation5], %s874
        // Predicated region
        $region109: #{if_nodes_run.1} parent=95 // pred_check
          %p876 = pneg %p101
        $region110: #{if_nodes_run.1} parent=95 // pred_check_branch
          %878 = sbr.rel (%p876) target = $region112
        $region111: #{if_nodes_run.1} parent=95 // pred_region
          %s879 = smul.u32 4, %s20
          %s880 = smul.u32 4, %s19
          %s881 = smul.addr %s879, 8
          %s882 = sadd.s32 %s880, %s881
          %s883 = smul.addr %s882, 2
          %s884 = scalar_lea.vmem %s2, %s883
          // Predicated region
          $region113: #{if_nodes_run.1} parent=111 // pred_check
            _
          $region114: #{if_nodes_run.1} parent=111 // pred_check_branch
            %886 = sbr.rel (0) target = $region116
          $region115: #{if_nodes_run.1} parent=111 // pred_region
            // Predicated region
            $region117: #{if_nodes_run.1} parent=115 // pred_check
              _
            $region118: #{if_nodes_run.1} parent=115 // pred_check_branch
              %888 = sbr.rel target = $region120
            $region119: #{if_nodes_run.1} parent=115 // pred_region
              // Predicated region
              $region132: #{if_nodes_run.1} parent=119 // pred_check
                _
              $region133: #{if_nodes_run.1} parent=119 // pred_check_branch
                %934 = sbr.rel (0) target = $region135
              $region134: #{if_nodes_run.1} parent=119 // pred_region
                loop: start=0, step=1, limit=1
                $region136: #{if_nodes_run.1} parent=134 // loop_pre_header
                  _
                $region137: #{if_nodes_run.1} parent=134 // loop_header
                  %s936 = sphi 0, %s940
                  %p937 = scmp.ge.s32.totalorder %s936, 1
                  %s941 = sphi %s871, %s871
                  %s942 = sphi %s884, %s884
                $region138: #{if_nodes_run.1} parent=134 // loop_header_branch
                  %939 = sbr.rel (%p937) target = $region142
                $region139: #{if_nodes_run.1} parent=134 // loop_body
                  _
                $region140: #{if_nodes_run.1} parent=134 // loop_footer
                  %s940 = sadd.s32 1, %s936
                $region141: #{if_nodes_run.1} parent=134 // loop_footer_branch
                  %935 = sbr.rel target = $region137
                $region142: #{if_nodes_run.1} parent=134 // loop_exit
                  _
                %s944 = ssub.s32 4, 1
                loop: start=0, step=1, limit=1
                $region143: #{if_nodes_run.1} parent=134 // loop_pre_header
                  _
                $region144: #{if_nodes_run.1} parent=134 // loop_header
                  %s946 = sphi 0, %s950
                  %p947 = scmp.ge.s32.totalorder %s946, 1
                  %s951 = sphi %s871, %s871
                  %s952 = sphi %s884, %s884
                $region145: #{if_nodes_run.1} parent=134 // loop_header_branch
                  %949 = sbr.rel (%p947) target = $region149
                $region146: #{if_nodes_run.1} parent=134 // loop_body
                  %v953 = vld [vmem:[%s951] sm:%s944]
                  %954 = vst [vmem:[%s952] sm:%s944] %v953
                  %v955 = vld [vmem:[%s951 + $0x2] sm:%s944]
                  %956 = vst [vmem:[%s952 + $0x2] sm:%s944] %v955
                  %v957 = vld [vmem:[%s951 + $0x4] sm:%s944]
                  %958 = vst [vmem:[%s952 + $0x4] sm:%s944] %v957
                  %v959 = vld [vmem:[%s951 + $0x6] sm:%s944]
                  %960 = vst [vmem:[%s952 + $0x6] sm:%s944] %v959
                  %v961 = vld [vmem:[%s951 + $0x8] sm:%s944]
                  %962 = vst [vmem:[%s952 + $0x10] sm:%s944] %v961
                  %v963 = vld [vmem:[%s951 + $0xa] sm:%s944]
                  %964 = vst [vmem:[%s952 + $0x12] sm:%s944] %v963
                  %v965 = vld [vmem:[%s951 + $0xc] sm:%s944]
                  %966 = vst [vmem:[%s952 + $0x14] sm:%s944] %v965
                  %v967 = vld [vmem:[%s951 + $0xe] sm:%s944]
                  %968 = vst [vmem:[%s952 + $0x16] sm:%s944] %v967
                  %v969 = vld [vmem:[%s951 + $0x10] sm:%s944]
                  %970 = vst [vmem:[%s952 + $0x20] sm:%s944] %v969
                  %v971 = vld [vmem:[%s951 + $0x12] sm:%s944]
                  %972 = vst [vmem:[%s952 + $0x22] sm:%s944] %v971
                  %v973 = vld [vmem:[%s951 + $0x14] sm:%s944]
                  %974 = vst [vmem:[%s952 + $0x24] sm:%s944] %v973
                  %v975 = vld [vmem:[%s951 + $0x16] sm:%s944]
                  %976 = vst [vmem:[%s952 + $0x26] sm:%s944] %v975
                  %v977 = vld [vmem:[%s951 + $0x18] sm:%s944]
                  %978 = vst [vmem:[%s952 + $0x30] sm:%s944] %v977
                  %v979 = vld [vmem:[%s951 + $0x1a] sm:%s944]
                  %980 = vst [vmem:[%s952 + $0x32] sm:%s944] %v979
                  %v981 = vld [vmem:[%s951 + $0x1c] sm:%s944]
                  %982 = vst [vmem:[%s952 + $0x34] sm:%s944] %v981
                  %v983 = vld [vmem:[%s951 + $0x1e] sm:%s944]
                  %984 = vst [vmem:[%s952 + $0x36] sm:%s944] %v983
                $region147: #{if_nodes_run.1} parent=134 // loop_footer
                  %s950 = sadd.s32 1, %s946
                $region148: #{if_nodes_run.1} parent=134 // loop_footer_branch
                  %945 = sbr.rel target = $region144
                $region149: #{if_nodes_run.1} parent=134 // loop_exit
                  _
              $region135: #{if_nodes_run.1} parent=119 // pred_fallthru
                _
            $region120: #{if_nodes_run.1} parent=115 // pred_fallthru
              _
            // Predicated region
            $region121: #{if_nodes_run.1} parent=115 // pred_check
              _
            $region122: #{if_nodes_run.1} parent=115 // pred_check_branch
              %890 = sbr.rel (0) target = $region124
            $region123: #{if_nodes_run.1} parent=115 // pred_region
              %s892 = ssub.s32 4, 1
              loop: start=0, step=1, limit=1
              $region125: #{if_nodes_run.1} parent=123 // loop_pre_header
                _
              $region126: #{if_nodes_run.1} parent=123 // loop_header
                %s894 = sphi 0, %s898
                %p895 = scmp.ge.s32.totalorder %s894, 1
                %s899 = sphi %s871, %s871
                %s900 = sphi %s884, %s884
              $region127: #{if_nodes_run.1} parent=123 // loop_header_branch
                %897 = sbr.rel (%p895) target = $region131
              $region128: #{if_nodes_run.1} parent=123 // loop_body
                %v901 = vld [vmem:[%s899] sm:%s892]
                %902 = vst [vmem:[%s900] sm:%s892] %v901
                %v903 = vld [vmem:[%s899 + $0x2] sm:%s892]
                %904 = vst [vmem:[%s900 + $0x2] sm:%s892] %v903
                %v905 = vld [vmem:[%s899 + $0x4] sm:%s892]
                %906 = vst [vmem:[%s900 + $0x4] sm:%s892] %v905
                %v907 = vld [vmem:[%s899 + $0x6] sm:%s892]
                %908 = vst [vmem:[%s900 + $0x6] sm:%s892] %v907
                %v909 = vld [vmem:[%s899 + $0x8] sm:%s892]
                %910 = vst [vmem:[%s900 + $0x10] sm:%s892] %v909
                %v911 = vld [vmem:[%s899 + $0xa] sm:%s892]
                %912 = vst [vmem:[%s900 + $0x12] sm:%s892] %v911
                %v913 = vld [vmem:[%s899 + $0xc] sm:%s892]
                %914 = vst [vmem:[%s900 + $0x14] sm:%s892] %v913
                %v915 = vld [vmem:[%s899 + $0xe] sm:%s892]
                %916 = vst [vmem:[%s900 + $0x16] sm:%s892] %v915
                %v917 = vld [vmem:[%s899 + $0x10] sm:%s892]
                %918 = vst [vmem:[%s900 + $0x20] sm:%s892] %v917
                %v919 = vld [vmem:[%s899 + $0x12] sm:%s892]
                %920 = vst [vmem:[%s900 + $0x22] sm:%s892] %v919
                %v921 = vld [vmem:[%s899 + $0x14] sm:%s892]
                %922 = vst [vmem:[%s900 + $0x24] sm:%s892] %v921
                %v923 = vld [vmem:[%s899 + $0x16] sm:%s892]
                %924 = vst [vmem:[%s900 + $0x26] sm:%s892] %v923
                %v925 = vld [vmem:[%s899 + $0x18] sm:%s892]
                %926 = vst [vmem:[%s900 + $0x30] sm:%s892] %v925
                %v927 = vld [vmem:[%s899 + $0x1a] sm:%s892]
                %928 = vst [vmem:[%s900 + $0x32] sm:%s892] %v927
                %v929 = vld [vmem:[%s899 + $0x1c] sm:%s892]
                %930 = vst [vmem:[%s900 + $0x34] sm:%s892] %v929
                %v931 = vld [vmem:[%s899 + $0x1e] sm:%s892]
                %932 = vst [vmem:[%s900 + $0x36] sm:%s892] %v931
              $region129: #{if_nodes_run.1} parent=123 // loop_footer
                %s898 = sadd.s32 1, %s894
              $region130: #{if_nodes_run.1} parent=123 // loop_footer_branch
                %893 = sbr.rel target = $region126
              $region131: #{if_nodes_run.1} parent=123 // loop_exit
                _
            $region124: #{if_nodes_run.1} parent=115 // pred_fallthru
              _
          $region116: #{if_nodes_run.1} parent=111 // pred_fallthru
            _
          %985 = vnop
        $region112: #{if_nodes_run.1} parent=95 // pred_fallthru
          _
        // Predicated region
        $region150: #{if_nodes_run.1} parent=95 // pred_check
          %p986 = pneg %p127
        $region151: #{if_nodes_run.1} parent=95 // pred_check_branch
          %988 = sbr.rel (%p986) target = $region153
        $region152: #{if_nodes_run.1} parent=95 // pred_region
          %s989 = smul.u32 4, %s19
          %s990 = smul.addr %s989, 8
          %s991 = scalar_lea.vmem %s3, %s990
          // Predicated region
          $region154: #{if_nodes_run.1} parent=152 // pred_check
            _
          $region155: #{if_nodes_run.1} parent=152 // pred_check_branch
            %993 = sbr.rel (0) target = $region157
          $region156: #{if_nodes_run.1} parent=152 // pred_region
            // Predicated region
            $region158: #{if_nodes_run.1} parent=156 // pred_check
              _
            $region159: #{if_nodes_run.1} parent=156 // pred_check_branch
              %995 = sbr.rel (0) target = $region161
            $region160: #{if_nodes_run.1} parent=156 // pred_region
              // Predicated region
              $region173: #{if_nodes_run.1} parent=160 // pred_check
                _
              $region174: #{if_nodes_run.1} parent=160 // pred_check_branch
                %1041 = sbr.rel (0) target = $region176
              $region175: #{if_nodes_run.1} parent=160 // pred_region
                loop: start=0, step=1, limit=1
                $region177: #{if_nodes_run.1} parent=175 // loop_pre_header
                  _
                $region178: #{if_nodes_run.1} parent=175 // loop_header
                  %s1043 = sphi 0, %s1047
                  %p1044 = scmp.ge.s32.totalorder %s1043, 1
                  %s1048 = sphi %s875, %s875
                  %s1049 = sphi %s991, %s991
                $region179: #{if_nodes_run.1} parent=175 // loop_header_branch
                  %1046 = sbr.rel (%p1044) target = $region183
                $region180: #{if_nodes_run.1} parent=175 // loop_body
                  %v1050 = vld [vmem:[%s1048] sm:$0xff]
                  %1051 = vst [vmem:[%s1049] sm:$0xff] %v1050
                  %v1052 = vld [vmem:[%s1048 + $0x8] sm:$0xff]
                  %1053 = vst [vmem:[%s1049 + $0x8] sm:$0xff] %v1052
                  %v1054 = vld [vmem:[%s1048 + $0x10] sm:$0xff]
                  %1055 = vst [vmem:[%s1049 + $0x10] sm:$0xff] %v1054
                  %v1056 = vld [vmem:[%s1048 + $0x18] sm:$0xff]
                  %1057 = vst [vmem:[%s1049 + $0x18] sm:$0xff] %v1056
                  %v1058 = vld [vmem:[%s1048 + $0x20] sm:$0xff]
                  %1059 = vst [vmem:[%s1049 + $0x40] sm:$0xff] %v1058
                  %v1060 = vld [vmem:[%s1048 + $0x28] sm:$0xff]
                  %1061 = vst [vmem:[%s1049 + $0x48] sm:$0xff] %v1060
                  %v1062 = vld [vmem:[%s1048 + $0x30] sm:$0xff]
                  %1063 = vst [vmem:[%s1049 + $0x50] sm:$0xff] %v1062
                  %v1064 = vld [vmem:[%s1048 + $0x38] sm:$0xff]
                  %1065 = vst [vmem:[%s1049 + $0x58] sm:$0xff] %v1064
                  %v1066 = vld [vmem:[%s1048 + $0x40] sm:$0xff]
                  %1067 = vst [vmem:[%s1049 + $0x80] sm:$0xff] %v1066
                  %v1068 = vld [vmem:[%s1048 + $0x48] sm:$0xff]
                  %1069 = vst [vmem:[%s1049 + $0x88] sm:$0xff] %v1068
                  %v1070 = vld [vmem:[%s1048 + $0x50] sm:$0xff]
                  %1071 = vst [vmem:[%s1049 + $0x90] sm:$0xff] %v1070
                  %v1072 = vld [vmem:[%s1048 + $0x58] sm:$0xff]
                  %1073 = vst [vmem:[%s1049 + $0x98] sm:$0xff] %v1072
                  %v1074 = vld [vmem:[%s1048 + $0x60] sm:$0xff]
                  %1075 = vst [vmem:[%s1049 + $0xc0] sm:$0xff] %v1074
                  %v1076 = vld [vmem:[%s1048 + $0x68] sm:$0xff]
                  %1077 = vst [vmem:[%s1049 + $0xc8] sm:$0xff] %v1076
                  %v1078 = vld [vmem:[%s1048 + $0x70] sm:$0xff]
                  %1079 = vst [vmem:[%s1049 + $0xd0] sm:$0xff] %v1078
                  %v1080 = vld [vmem:[%s1048 + $0x78] sm:$0xff]
                  %1081 = vst [vmem:[%s1049 + $0xd8] sm:$0xff] %v1080
                $region181: #{if_nodes_run.1} parent=175 // loop_footer
                  %s1047 = sadd.s32 1, %s1043
                $region182: #{if_nodes_run.1} parent=175 // loop_footer_branch
                  %1042 = sbr.rel target = $region178
                $region183: #{if_nodes_run.1} parent=175 // loop_exit
                  _
              $region176: #{if_nodes_run.1} parent=160 // pred_fallthru
                _
              // Predicated region
              $region184: #{if_nodes_run.1} parent=160 // pred_check
                _
              $region185: #{if_nodes_run.1} parent=160 // pred_check_branch
                %1083 = sbr.rel target = $region187
              $region186: #{if_nodes_run.1} parent=160 // pred_region
                _
              $region187: #{if_nodes_run.1} parent=160 // pred_fallthru
                _
            $region161: #{if_nodes_run.1} parent=156 // pred_fallthru
              _
            // Predicated region
            $region162: #{if_nodes_run.1} parent=156 // pred_check
              _
            $region163: #{if_nodes_run.1} parent=156 // pred_check_branch
              %997 = sbr.rel target = $region165
            $region164: #{if_nodes_run.1} parent=156 // pred_region
              %s999 = ssub.s32 256, 1
              loop: start=0, step=1, limit=1
              $region166: #{if_nodes_run.1} parent=164 // loop_pre_header
                _
              $region167: #{if_nodes_run.1} parent=164 // loop_header
                %s1001 = sphi 0, %s1005
                %p1002 = scmp.ge.s32.totalorder %s1001, 1
                %s1006 = sphi %s875, %s875
                %s1007 = sphi %s991, %s991
              $region168: #{if_nodes_run.1} parent=164 // loop_header_branch
                %1004 = sbr.rel (%p1002) target = $region172
              $region169: #{if_nodes_run.1} parent=164 // loop_body
                %v1008 = vld [vmem:[%s1006] sm:%s999]
                %1009 = vst [vmem:[%s1007] sm:%s999] %v1008
                %v1010 = vld [vmem:[%s1006 + $0x8] sm:%s999]
                %1011 = vst [vmem:[%s1007 + $0x8] sm:%s999] %v1010
                %v1012 = vld [vmem:[%s1006 + $0x10] sm:%s999]
                %1013 = vst [vmem:[%s1007 + $0x10] sm:%s999] %v1012
                %v1014 = vld [vmem:[%s1006 + $0x18] sm:%s999]
                %1015 = vst [vmem:[%s1007 + $0x18] sm:%s999] %v1014
                %v1016 = vld [vmem:[%s1006 + $0x20] sm:%s999]
                %1017 = vst [vmem:[%s1007 + $0x40] sm:%s999] %v1016
                %v1018 = vld [vmem:[%s1006 + $0x28] sm:%s999]
                %1019 = vst [vmem:[%s1007 + $0x48] sm:%s999] %v1018
                %v1020 = vld [vmem:[%s1006 + $0x30] sm:%s999]
                %1021 = vst [vmem:[%s1007 + $0x50] sm:%s999] %v1020
                %v1022 = vld [vmem:[%s1006 + $0x38] sm:%s999]
                %1023 = vst [vmem:[%s1007 + $0x58] sm:%s999] %v1022
                %v1024 = vld [vmem:[%s1006 + $0x40] sm:%s999]
                %1025 = vst [vmem:[%s1007 + $0x80] sm:%s999] %v1024
                %v1026 = vld [vmem:[%s1006 + $0x48] sm:%s999]
                %1027 = vst [vmem:[%s1007 + $0x88] sm:%s999] %v1026
                %v1028 = vld [vmem:[%s1006 + $0x50] sm:%s999]
                %1029 = vst [vmem:[%s1007 + $0x90] sm:%s999] %v1028
                %v1030 = vld [vmem:[%s1006 + $0x58] sm:%s999]
                %1031 = vst [vmem:[%s1007 + $0x98] sm:%s999] %v1030
                %v1032 = vld [vmem:[%s1006 + $0x60] sm:%s999]
                %1033 = vst [vmem:[%s1007 + $0xc0] sm:%s999] %v1032
                %v1034 = vld [vmem:[%s1006 + $0x68] sm:%s999]
                %1035 = vst [vmem:[%s1007 + $0xc8] sm:%s999] %v1034
                %v1036 = vld [vmem:[%s1006 + $0x70] sm:%s999]
                %1037 = vst [vmem:[%s1007 + $0xd0] sm:%s999] %v1036
                %v1038 = vld [vmem:[%s1006 + $0x78] sm:%s999]
                %1039 = vst [vmem:[%s1007 + $0xd8] sm:%s999] %v1038
              $region170: #{if_nodes_run.1} parent=164 // loop_footer
                %s1005 = sadd.s32 1, %s1001
              $region171: #{if_nodes_run.1} parent=164 // loop_footer_branch
                %1000 = sbr.rel target = $region167
              $region172: #{if_nodes_run.1} parent=164 // loop_exit
                _
            $region165: #{if_nodes_run.1} parent=156 // pred_fallthru
              _
          $region157: #{if_nodes_run.1} parent=152 // pred_fallthru
            _
          %1084 = vnop
        $region153: #{if_nodes_run.1} parent=95 // pred_fallthru
          _
      $region96: #{if_nodes_run.1} parent=5 // pred_fallthru
        _
      %p1085 = scmp.le.s32.totalorder 2, %s10
      // Predicated region
      $region188: #{if_nodes_run.1} parent=5 // pred_check
        %p1086 = pneg %p1085
      $region189: #{if_nodes_run.1} parent=5 // pred_check_branch
        %1088 = sbr.rel (%p1086) target = $region191
      $region190: #{if_nodes_run.1} parent=5 // pred_region
        %s1089 = ssub.s32 %s10, 2
        // Predicated region
        $region192: #{if_nodes_run.1} parent=190 // pred_check
          %p1090 = pneg %p107
        $region193: #{if_nodes_run.1} parent=190 // pred_check_branch
          %1092 = sbr.rel (%p1090) target = $region195
        $region194: #{if_nodes_run.1} parent=190 // pred_region
          %s1093 = sand.u32 %s92, 1
          %s1094 = sand.u32 %s92, 1
          %s1095 = smul.addr %s1094, 32
          %s1096 = scalar_lea.vmem [#allocation4], %s1095
        $region195: #{if_nodes_run.1} parent=190 // pred_fallthru
          _
        // Predicated region
        $region196: #{if_nodes_run.1} parent=190 // pred_check
          %p1097 = pneg %p133
        $region197: #{if_nodes_run.1} parent=190 // pred_check_branch
          %1099 = sbr.rel (%p1097) target = $region199
        $region198: #{if_nodes_run.1} parent=190 // pred_region
          %s1100 = sand.u32 %s118, 1
          %s1101 = sand.u32 %s118, 1
          %s1102 = smul.addr %s1101, 128
          %s1103 = scalar_lea.vmem [#allocation5], %s1102
        $region199: #{if_nodes_run.1} parent=190 // pred_fallthru
          _
      $region191: #{if_nodes_run.1} parent=5 // pred_fallthru
        _
    $region6: #{if_nodes_run.1} parent=1 // loop_footer
      %s14 = sadd.s32 1, %s10
    $region7: #{if_nodes_run.1} parent=1 // loop_footer_branch
      %9 = sbr.rel target = $region3
    $region8: #{if_nodes_run.1} parent=1 // loop_exit
      _

</llo_original>
